<compile_context>
chip_gen: v7x
topology: tpu7x:2x2x1
jax: 0.10.0
libtpu: 0.0.40
codegen_flags: <defaults>
</compile_context>

<pallas_src>
import numpy as np
import jax
import jax.numpy as jnp
from jax.experimental import pallas as pl
from jax.experimental.pallas import tpu as pltpu

# ----------------------------- module config -------------------------------
NUM_LEVELS = 16
LEVEL_DIM = 2                      # features_per_level
BASE_RES = 16
MAX_RES = 2048
LOG2_HASHMAP_SIZE = 16             # shrunk from 22 so the synthetic table stays small
HASHMAP_SIZE = 1 << LOG2_HASHMAP_SIZE
NUM_LAYERS = 3
HIDDEN_DIM = 64
IN_DIM = NUM_LEVELS * LEVEL_DIM    # 32
N_ENCODERS = 1

# MXU packing factor: 4 points share one pushed MXU column.
NPACK = 4
PIN = NPACK * IN_DIM               # 128
PHID = NPACK * HIDDEN_DIM          # 256

_PRIMES = (1, 2654435761, 805459861)


# --------------------------- hash-grid encoder ------------------------------
def make_encoder_params(key):
    """One concatenated hash-grid table + per-level static metadata."""
    growth = np.exp((np.log(MAX_RES) - np.log(BASE_RES)) / (NUM_LEVELS - 1))
    resolutions, level_sizes, use_hash = [], [], []
    for level in range(NUM_LEVELS):
        res = int(np.ceil(BASE_RES * growth ** level))
        dense_size = (res + 1) ** 3
        hashed = dense_size > HASHMAP_SIZE        # decided on the RAW dense size
        size = HASHMAP_SIZE if hashed else dense_size
        size = int(np.ceil(size / 8) * 8)         # pad table rows to multiple of 8
        resolutions.append(res)
        level_sizes.append(size)
        use_hash.append(hashed)
    offsets = np.concatenate([[0], np.cumsum(level_sizes)])[:-1]
    total = int(np.sum(level_sizes))
    # uniform(-1e-4, 1e-4) like torch-ngp
    table = jax.random.uniform(key, (total, LEVEL_DIM), jnp.float32, -1e-4, 1e-4)
    return dict(
        resolutions=np.asarray(resolutions, np.float32),
        strides=np.asarray([r + 1 for r in resolutions], np.uint32),
        use_hash=np.asarray(use_hash, bool),
        offsets=np.asarray(offsets, np.uint32),
        table=table,
    )


def hash_encode(x, enc):
    """x: [N, 3] in [0, 1] -> features [N, IN_DIM] float32.

    All 16 levels x 8 corners are handled by ONE batched gather into the
    concatenated table (vectorized index math + trilinear interpolation).
    No integer modulus anywhere: hashed levels use a power-of-two AND mask,
    dense levels are clamped to the (res+1)^3 grid so no wrap is possible.
    """
    n = x.shape[0]
    res_f   = enc["resolutions"].astype(jnp.float32)   # [L]
    strides = enc["strides"].astype(jnp.uint32)        # [L] = res + 1
    hashed  = enc["use_hash"]                          # [L] bool
    offs    = enc["offsets"].astype(jnp.uint32)        # [L]
    table   = enc["table"]                             # [T, 2] f32

    pos  = x[:, None, :] * res_f[None, :, None] + 0.5  # [N, L, 3]
    pos0 = jnp.floor(pos)
    frac = pos - pos0
    pos0 = pos0.astype(jnp.uint32)

    corners = jnp.asarray(
        [[(c >> d) & 1 for d in range(3)] for c in range(8)], jnp.uint32)  # [8,3]
    idx3 = pos0[:, :, None, :] + corners[None, None, :, :]                 # [N,L,8,3]
    # Dense levels: clamp corners to the (res+1)^3 grid so boundary voxels do
    # not alias.  NOTE: this clamp is what makes the dropped modulus safe for
    # dense levels — keep clamp and mask changes coupled.
    max_idx = (strides - 1)[None, :, None, None]
    idx3 = jnp.where(hashed[None, :, None, None], idx3,
                     jnp.minimum(idx3, max_idx))

    p0, p1, p2 = (np.uint32(p) for p in _PRIMES)
    # Hashed levels: power-of-two table -> AND mask instead of a slow uint32 %.
    h_hash = ((idx3[..., 0] * p0) ^ (idx3[..., 1] * p1) ^ (idx3[..., 2] * p2)) \
             & np.uint32(HASHMAP_SIZE - 1)
    s = strides[None, :, None]
    # Dense levels: idx3 is clamped to [0, stride-1]^3 so h_dense < stride^3
    # <= HASHMAP_SIZE; no modulus needed.
    h_dense = idx3[..., 0] + idx3[..., 1] * s + idx3[..., 2] * s * s
    idx = jnp.where(hashed[None, :, None], h_hash, h_dense)
    idx = (idx + offs[None, :, None]).astype(jnp.int32)                    # [N,L,8]

    w = jnp.where(corners.astype(bool)[None, None, :, :],
                  frac[:, :, None, :], 1.0 - frac[:, :, None, :])          # [N,L,8,3]
    w = w[..., 0] * w[..., 1] * w[..., 2]                                  # [N,L,8]

    # TODO(synk): this per-point gather stays in XLA (no clean vectorized VMEM
    # gather in Pallas for a ~900K-row table).
    vals = jnp.take(table, idx, axis=0)                                    # [N,L,8,2]
    feat = jnp.sum(w[..., None] * vals, axis=2)                            # [N,L,2]
    return feat.reshape(n, NUM_LEVELS * LEVEL_DIM)                         # [N,32] f32


# ----------------------------- Pallas MLP kernel ----------------------------
def sdf_mlp_kernel(x_ref, w0_ref, w1_ref, w2_ref, o_ref):
    # x_ref:  [PIN=128, TNP]   bf16  (4 points stacked per lane column)
    # w0_ref: [PHID=256, PIN]  bf16  blockdiag(W0 x4), PyTorch (out,in) layout
    # w1_ref: [PHID, PHID]     bf16  blockdiag(W1 x4)
    # w2_ref: [HIDDEN, 1]      bf16  (single copy; applied per packed group)
    # o_ref:  [NPACK=4, TNP]   f32   lane-dense output, row k = point 4j+k
    x = x_ref[...]
    h = jnp.dot(w0_ref[...], x, preferred_element_type=jnp.float32)    # [256, TNP]
    h = jnp.maximum(h.astype(jnp.bfloat16), 0)                         # bf16 ReLU
    h = jnp.dot(w1_ref[...], h, preferred_element_type=jnp.float32)    # [256, TNP]
    h = jnp.maximum(h, 0.0)
    # Final 64->1 layer per packed group on the VPU/XLU (multiply + sublane
    # reduce) instead of a skinny MXU pass; output rows are lane-dense.
    w2 = w2_ref[...].astype(jnp.float32)                               # [64, 1]
    for k in range(NPACK):
        o_ref[k:k + 1, :] = jnp.sum(
            h[k * HIDDEN_DIM:(k + 1) * HIDDEN_DIM, :] * w2,
            axis=0, keepdims=True)                                     # [1, TNP]


def _pick_tnp(npc):
    """Tile size in packed columns (1 column = NPACK points).

    Largest tile amortizes the ~0.35us per-grid-step overhead (2048 cols =
    8192 points/step); among usable tiles prefer an EVEN step count so the
    'parallel' grid axis balances across v7x's 2 TensorCores.
    """
    cands = (2048, 1024, 512, 256, 128)
    for tn in cands:                      # largest tile with an even #steps >= 2
        steps = -(-npc // tn)
        if steps >= 2 and steps % 2 == 0:
            return tn
    for tn in cands:                      # fallback: largest tile with >= 2 steps
        if npc >= 2 * tn:
            return tn
    return 128


def _block_diag(w, copies):
    """[out, in] -> [copies*out, copies*in] block-diagonal (kron(I, w))."""
    return jnp.kron(jnp.eye(copies, dtype=w.dtype), w)


def sdf_mlp(feat, w0, w1, w2):
    """feat: [N, IN_DIM] f32; weights in PyTorch (out,in) layout (w2 as [64,1]).

    Returns sdf [N, 1] f32.
    """
    n = feat.shape[0]
    pad = (-n) % NPACK
    if pad:
        feat = jnp.pad(feat, ((0, pad), (0, 0)))
    npc = feat.shape[0] // NPACK
    # bf16 cast BEFORE the relayout; transpose folded into the packing reshape.
    x_packed = feat.astype(jnp.bfloat16).reshape(npc, PIN).T            # [128, npc]

    # Block-diagonal weight packing: stream NPACK points per pushed MXU column.
    w0bd = _block_diag(w0.astype(jnp.bfloat16), NPACK)                  # [256, 128]
    w1bd = _block_diag(w1.astype(jnp.bfloat16), NPACK)                  # [256, 256]
    w2b = w2.astype(jnp.bfloat16)                                       # [64, 1]

    tnp = _pick_tnp(npc)
    grid = (pl.cdiv(npc, tnp),)      # no jnp.pad of the point axis: Pallas
                                     # handles the remainder block.
    out = pl.pallas_call(
        sdf_mlp_kernel,
        out_shape=jax.ShapeDtypeStruct((NPACK, npc), jnp.float32),
        grid_spec=pltpu.PrefetchScalarGridSpec(
            num_scalar_prefetch=0,
            grid=grid,
            in_specs=[
                pl.BlockSpec((PIN, tnp), lambda i: (0, i)),
                pl.BlockSpec((PHID, PIN), lambda i: (0, 0)),
                pl.BlockSpec((PHID, PHID), lambda i: (0, 0)),
                pl.BlockSpec((HIDDEN_DIM, 1), lambda i: (0, 0)),
            ],
            out_specs=pl.BlockSpec((NPACK, tnp), lambda i: (0, i)),
        ),
        compiler_params=pltpu.CompilerParams(
            dimension_semantics=("parallel",)),
    )(x_packed, w0bd, w1bd, w2b)                                        # [4, npc]

    # Un-interleave: column j holds points 4j..4j+3.
    sdf = out.T.reshape(npc * NPACK, 1)
    return sdf[:n]


# ------------------------------ forward pass --------------------------------
def sdf_network_forward(points, encoders, mlp_weights):
    """points: [N, n_encoders, 3] f32 -> (sdf [N*n_encoders, 1] f32, None)."""
    feats = [hash_encode(points[:, i], encoders[i]) for i in range(N_ENCODERS)]
    feat = feats[0] if N_ENCODERS == 1 else jnp.concatenate(feats, axis=0)
    # skips=[] and clip_sdf=None in the default config -> plain 3-layer MLP.
    sdf = sdf_mlp(feat, *mlp_weights)
    # use_color=False -> return (sdf, None)
    return sdf, None


# --------------------------------- main --------------------------------------
if __name__ == "__main__":
    key = jax.random.PRNGKey(0)
    k_enc, k_pts, k0, k1, k2 = jax.random.split(key, 5)

    enc = make_encoder_params(k_enc)

    # nn.Linear(bias=False) default init: U(-1/sqrt(fan_in), 1/sqrt(fan_in)).
    # PyTorch (out_features, in_features) layout; the last layer is stored
    # transposed as [64, 1].
    b0 = 1.0 / np.sqrt(IN_DIM)
    b1 = 1.0 / np.sqrt(HIDDEN_DIM)
    w0 = jax.random.uniform(k0, (HIDDEN_DIM, IN_DIM), jnp.float32, -b0, b0
                            ).astype(jnp.bfloat16)
    w1 = jax.random.uniform(k1, (HIDDEN_DIM, HIDDEN_DIM), jnp.float32, -b1, b1
                            ).astype(jnp.bfloat16)
    w2 = jax.random.uniform(k2, (HIDDEN_DIM, 1), jnp.float32, -b1, b1
                            ).astype(jnp.bfloat16)

    # N chosen so the packed grid has a remainder block AND an even step count.
    N = 2000
    points = jax.random.uniform(k_pts, (N, N_ENCODERS, 3), jnp.float32)  # in [0,1)

    fwd = jax.jit(sdf_network_forward)
    sdf, color = fwd(points, [enc], (w0, w1, w2))
    sdf = jax.block_until_ready(sdf)

    assert sdf.shape == (N * N_ENCODERS, 1), sdf.shape
    assert sdf.dtype == jnp.float32
    assert color is None
    assert bool(jnp.all(jnp.isfinite(sdf)))

    # Tolerance check against a pure-JAX f32 MLP reference on the same
    # bf16 weights / bf16-rounded features (tracks the kernel's f32-accumulated
    # bf16 matmuls up to accumulation order).
    feat = hash_encode(points[:, 0], enc)                               # [N, 32] f32
    xb = feat.astype(jnp.bfloat16).astype(jnp.float32)
    w0f, w1f, w2f = (w0.astype(jnp.float32), w1.astype(jnp.float32),
                     w2.astype(jnp.float32))
    h0 = jnp.maximum(xb @ w0f.T, 0.0).astype(jnp.bfloat16).astype(jnp.float32)
    h1 = jnp.maximum(h0 @ w1f.T, 0.0)
    ref = h1 @ w2f                                                      # [N, 1]
    err = float(jnp.max(jnp.abs(sdf - ref)))
    scale = float(jnp.max(jnp.abs(ref))) + 1e-12
    assert err <= 1e-2 * scale + 1e-6, (err, scale)

    print("KERNEL_OK")
</pallas_src>

<mosaic_0001>
module attributes {stable_mosaic.version = 11 : i64} {
  func.func private @main(%arg0: i32) attributes {dimension_semantics = [#tpu.dimension_semantics<core_parallel>], iteration_bounds = array<i64: 2>, tpu.core_type = #tpu.core_type<sc_scalar_subcore>, window_params = []} {
    return
  }
}

module attributes {stable_mosaic.version = 11 : i64} {
  func.func private @main(%arg0: i32) attributes {dimension_semantics = [#tpu.dimension_semantics<core_parallel>], iteration_bounds = array<i64: 2>, tpu.core_type = #tpu.core_type<sc_scalar_subcore>, window_params = []} {
    return
  }
}

module attributes {stable_mosaic.version = 11 : i64} {
  func.func @sdf_mlp_kernel(%arg0: i32, %arg1: memref<128x256xbf16, #tpu.memory_space<vmem>>, %arg2: memref<256x128xbf16, #tpu.memory_space<vmem>>, %arg3: memref<256x256xbf16, #tpu.memory_space<vmem>>, %arg4: memref<64x1xbf16, #tpu.memory_space<vmem>>, %arg5: memref<4x256xf32, #tpu.memory_space<vmem>>) attributes {dimension_semantics = [#tpu.dimension_semantics<parallel>], iteration_bounds = array<i64: 2>, scalar_prefetch = 0 : i64, scratch_operands = 0 : i64, tpu.core_type = #tpu.core_type<tc>, window_params = [{transform_indices = @transform_0, window_bounds = array<i64: 128, 256>}, {pipeline_mode = #tpu.pipeline_mode<synchronous>, transform_indices = @transform_1, window_bounds = array<i64: 256, 128>}, {pipeline_mode = #tpu.pipeline_mode<synchronous>, transform_indices = @transform_2, window_bounds = array<i64: 256, 256>}, {pipeline_mode = #tpu.pipeline_mode<synchronous>, transform_indices = @transform_3, window_bounds = array<i64: 64, 1>}, {transform_indices = @transform_4, window_bounds = array<i64: 4, 256>}]} {
    %c0 = arith.constant 0 : index
    %c0_0 = arith.constant 0 : index
    %0 = vector.load %arg1[%c0, %c0_0] : memref<128x256xbf16, #tpu.memory_space<vmem>>, vector<128x256xbf16>
    %c0_1 = arith.constant 0 : index
    %c0_2 = arith.constant 0 : index
    %1 = vector.load %arg2[%c0_1, %c0_2] : memref<256x128xbf16, #tpu.memory_space<vmem>>, vector<256x128xbf16>
    %cst = arith.constant dense<0.000000e+00> : vector<256x256xf32>
    %2 = tpu.matmul %1, %0, %cst {dimension_numbers = #tpu.dot_dimension_numbers<[1], [0], [0], [1], [0, 0, 1, 1], [], []>} : vector<256x128xbf16>, vector<128x256xbf16>, vector<256x256xf32> -> vector<256x256xf32>
    %3 = arith.truncf %2 : vector<256x256xf32> to vector<256x256xbf16>
    %cst_3 = arith.constant 0.000000e+00 : bf16
    %4 = vector.broadcast %cst_3 : bf16 to vector<256x256xbf16>
    %5 = arith.maximumf %3, %4 : vector<256x256xbf16>
    %c0_4 = arith.constant 0 : index
    %c0_5 = arith.constant 0 : index
    %6 = vector.load %arg3[%c0_4, %c0_5] : memref<256x256xbf16, #tpu.memory_space<vmem>>, vector<256x256xbf16>
    %cst_6 = arith.constant dense<0.000000e+00> : vector<256x256xf32>
    %7 = tpu.matmul %6, %5, %cst_6 {dimension_numbers = #tpu.dot_dimension_numbers<[1], [0], [0], [1], [0, 0, 1, 1], [], []>} : vector<256x256xbf16>, vector<256x256xbf16>, vector<256x256xf32> -> vector<256x256xf32>
    %cst_7 = arith.constant 0.000000e+00 : f32
    %8 = vector.broadcast %cst_7 : f32 to vector<256x256xf32>
    %9 = arith.maximumf %7, %8 : vector<256x256xf32>
    %c0_8 = arith.constant 0 : index
    %c0_9 = arith.constant 0 : index
    %10 = vector.load %arg4[%c0_8, %c0_9] : memref<64x1xbf16, #tpu.memory_space<vmem>>, vector<64x1xbf16>
    %11 = arith.extf %10 : vector<64x1xbf16> to vector<64x1xf32>
    %12 = vector.extract_strided_slice %9 {offsets = [0, 0], sizes = [64, 256], strides = [1, 1]} : vector<256x256xf32> to vector<64x256xf32>
    %13 = vector.broadcast %11 : vector<64x1xf32> to vector<64x256xf32>
    %14 = arith.mulf %12, %13 : vector<64x256xf32>
    %cst_10 = arith.constant dense<0.000000e+00> : vector<256xf32>
    %15 = vector.multi_reduction <add>, %14, %cst_10 [0] : vector<64x256xf32> to vector<256xf32>
    %16 = vector.shape_cast %15 : vector<256xf32> to vector<1x256xf32>
    %c0_11 = arith.constant 0 : index
    %c0_12 = arith.constant 0 : index
    %17 = vector.load %arg5[%c0_11, %c0_12] : memref<4x256xf32, #tpu.memory_space<vmem>>, vector<1x256xf32>
    tpu.vector_store %arg5[%c0_11, %c0_12], %16 {strides = array<i32>} : memref<4x256xf32, #tpu.memory_space<vmem>>, vector<1x256xf32>,
    %18 = vector.extract_strided_slice %9 {offsets = [64, 0], sizes = [64, 256], strides = [1, 1]} : vector<256x256xf32> to vector<64x256xf32>
    %19 = vector.broadcast %11 : vector<64x1xf32> to vector<64x256xf32>
    %20 = arith.mulf %18, %19 : vector<64x256xf32>
    %cst_13 = arith.constant dense<0.000000e+00> : vector<256xf32>
    %21 = vector.multi_reduction <add>, %20, %cst_13 [0] : vector<64x256xf32> to vector<256xf32>
    %22 = vector.shape_cast %21 : vector<256xf32> to vector<1x256xf32>
    %c1 = arith.constant 1 : index
    %c0_14 = arith.constant 0 : index
    %23 = vector.load %arg5[%c1, %c0_14] : memref<4x256xf32, #tpu.memory_space<vmem>>, vector<1x256xf32>
    tpu.vector_store %arg5[%c1, %c0_14], %22 {strides = array<i32>} : memref<4x256xf32, #tpu.memory_space<vmem>>, vector<1x256xf32>,
    %24 = vector.extract_strided_slice %9 {offsets = [128, 0], sizes = [64, 256], strides = [1, 1]} : vector<256x256xf32> to vector<64x256xf32>
    %25 = vector.broadcast %11 : vector<64x1xf32> to vector<64x256xf32>
    %26 = arith.mulf %24, %25 : vector<64x256xf32>
    %cst_15 = arith.constant dense<0.000000e+00> : vector<256xf32>
    %27 = vector.multi_reduction <add>, %26, %cst_15 [0] : vector<64x256xf32> to vector<256xf32>
    %28 = vector.shape_cast %27 : vector<256xf32> to vector<1x256xf32>
    %c2 = arith.constant 2 : index
    %c0_16 = arith.constant 0 : index
    %29 = vector.load %arg5[%c2, %c0_16] : memref<4x256xf32, #tpu.memory_space<vmem>>, vector<1x256xf32>
    tpu.vector_store %arg5[%c2, %c0_16], %28 {strides = array<i32>} : memref<4x256xf32, #tpu.memory_space<vmem>>, vector<1x256xf32>,
    %30 = vector.extract_strided_slice %9 {offsets = [192, 0], sizes = [64, 256], strides = [1, 1]} : vector<256x256xf32> to vector<64x256xf32>
    %31 = vector.broadcast %11 : vector<64x1xf32> to vector<64x256xf32>
    %32 = arith.mulf %30, %31 : vector<64x256xf32>
    %cst_17 = arith.constant dense<0.000000e+00> : vector<256xf32>
    %33 = vector.multi_reduction <add>, %32, %cst_17 [0] : vector<64x256xf32> to vector<256xf32>
    %34 = vector.shape_cast %33 : vector<256xf32> to vector<1x256xf32>
    %c3 = arith.constant 3 : index
    %c0_18 = arith.constant 0 : index
    %35 = vector.load %arg5[%c3, %c0_18] : memref<4x256xf32, #tpu.memory_space<vmem>>, vector<1x256xf32>
    tpu.vector_store %arg5[%c3, %c0_18], %34 {strides = array<i32>} : memref<4x256xf32, #tpu.memory_space<vmem>>, vector<1x256xf32>,
    return
  }
  func.func @transform_0(%arg0: i32) -> (i32, i32) {
    %c0_i32 = arith.constant 0 : i32
    %c0_i32_0 = arith.constant 0 : i32
    return %c0_i32, %arg0 : i32, i32
  }
  func.func @transform_1(%arg0: i32) -> (i32, i32) {
    %c0_i32 = arith.constant 0 : i32
    %c0_i32_0 = arith.constant 0 : i32
    %c0_i32_1 = arith.constant 0 : i32
    return %c0_i32, %c0_i32_0 : i32, i32
  }
  func.func @transform_2(%arg0: i32) -> (i32, i32) {
    %c0_i32 = arith.constant 0 : i32
    %c0_i32_0 = arith.constant 0 : i32
    %c0_i32_1 = arith.constant 0 : i32
    return %c0_i32, %c0_i32_0 : i32, i32
  }
  func.func @transform_3(%arg0: i32) -> (i32, i32) {
    %c0_i32 = arith.constant 0 : i32
    %c0_i32_0 = arith.constant 0 : i32
    %c0_i32_1 = arith.constant 0 : i32
    return %c0_i32, %c0_i32_0 : i32, i32
  }
  func.func @transform_4(%arg0: i32) -> (i32, i32) {
    %c0_i32 = arith.constant 0 : i32
    %c0_i32_0 = arith.constant 0 : i32
    return %c0_i32, %arg0 : i32, i32
  }
}

</mosaic_0001>

<llo_original>
// kernel: sdf_network_forward.1
$region0: #{sdf_network_forward.1}
  #allocation0 [shape = 'u32[]', space=smem, size = 0x4, offset = 0x4, fixed_abs, tag = 'smem constant byte address 0x4 - core index']
  #allocation1 [shape = 'u32[144,128]{1,0:T(1,128)}', space=vmem, size = 0x12000, scoped, tag = 'internal scratch']
  %s0 = inlined_call_operand.vmem [shape: bf16[128,500], index: 0, kind: input, shape index: {}]
  %s1 = inlined_call_operand.vmem [shape: bf16[256,128], index: 1, kind: input, shape index: {}]
  %s2 = inlined_call_operand.vmem [shape: bf16[256,256], index: 2, kind: input, shape index: {}]
  %s3 = inlined_call_operand.vmem [shape: bf16[64,1], index: 3, kind: input, shape index: {}]
  %s4 = inlined_call_operand.vmem [shape: f32[4,500], index: 4, kind: output, shape index: {}]
  %s5 = sld [smem:[#allocation0]]
  $region87: #{sdf_network_forward.1} parent=0
    _
  %s7 = ssub.s32 1, %s5
  %s8 = scalar_select 0, %s7, %s5
  $region1: #{sdf_network_forward.1} parent=0
    #allocation2 [shape = 'u8[131072]{0}', space=vmem, size = 0x20000, scoped, tag = 'input window, operand 0']
    loop: start=0, step=1, limit=4
    $region2: #{sdf_network_forward.1} parent=1 // loop_pre_header
      _
    $region3: #{sdf_network_forward.1} parent=1 // loop_header
      %s10 = sphi 0, %s14
      %p11 = scmp.ge.s32.totalorder %s10, 4
      %s20 = sphi 0, %s22
      %s23 = sphi 0, %s20
      %s24 = sphi 0, %s23
      %s40 = sphi 0, %s24
      %s44 = sphi 0, %s44
      %s46 = sphi 0, %s44
      %s47 = sphi 0, %s46
      %s61 = sphi 0, %s47
      %s65 = sphi 0, %s65
      %s67 = sphi 0, %s65
      %s68 = sphi 0, %s67
      %s82 = sphi 0, %s68
      %s86 = sphi 0, %s86
      %s88 = sphi 0, %s86
      %s89 = sphi 0, %s88
      %s103 = sphi 0, %s89
      %s109 = sphi 0, %s111
      %s112 = sphi 0, %s109
      %s113 = sphi 0, %s112
      %s129 = sphi 0, %s113
    $region4: #{sdf_network_forward.1} parent=1 // loop_header_branch
      %13 = sbr.rel (%p11) target = $region8
    $region5: #{sdf_network_forward.1} parent=1 // loop_body
      %s15 = ssub.s32 %s10, 1
      %s16 = ssub.s32 %s10, 2
      %s17 = sadd.s32 %s10, 1
      %s18 = ssub.s32 %s10, %s17
      %p19 = scmp.eq.s32.totalorder %s18, 0
      %s21 = sadd.s32 %s20, 1
      %s22 = scalar_select %p19, %s20, %s21
      %p25 = pneg %p19
      %p26 = scmp.eq.s32.totalorder %s10, 1
      %p27 = por %p25, %p26
      %p28 = scmp.ne.s32.totalorder %s20, %s23
      %p29 = scmp.eq.s32.totalorder %s10, 0
      %p30 = por %p28, %p29
      %p31 = scmp.ne.s32.totalorder %s20, %s23
      %p32 = scmp.eq.s32.totalorder %s15, 1
      %p33 = por %p31, %p32
      %p34 = scmp.ne.s32.totalorder %s23, %s24
      %p35 = scmp.eq.s32.totalorder %s15, 0
      %p36 = por %p34, %p35
      %p37 = scmp.ne.s32.totalorder %s23, %s24
      %p38 = scmp.eq.s32.totalorder %s16, 1
      %p39 = por %p37, %p38
      %p41 = scmp.ne.s32.totalorder %s24, %s40
      %p42 = scmp.eq.s32.totalorder %s16, 0
      %p43 = por %p41, %p42
      %s45 = sadd.s32 %s44, 1
      %p48 = scmp.eq.s32.totalorder %s10, 1
      %p49 = scmp.ne.s32.totalorder %s44, %s46
      %p50 = scmp.eq.s32.totalorder %s10, 0
      %p51 = por %p49, %p50
      %p52 = scmp.ne.s32.totalorder %s44, %s46
      %p53 = scmp.eq.s32.totalorder %s15, 1
      %p54 = por %p52, %p53
      %p55 = scmp.ne.s32.totalorder %s46, %s47
      %p56 = scmp.eq.s32.totalorder %s15, 0
      %p57 = por %p55, %p56
      %p58 = scmp.ne.s32.totalorder %s46, %s47
      %p59 = scmp.eq.s32.totalorder %s16, 1
      %p60 = por %p58, %p59
      %p62 = scmp.ne.s32.totalorder %s47, %s61
      %p63 = scmp.eq.s32.totalorder %s16, 0
      %p64 = por %p62, %p63
      %s66 = sadd.s32 %s65, 1
      %p69 = scmp.eq.s32.totalorder %s10, 1
      %p70 = scmp.ne.s32.totalorder %s65, %s67
      %p71 = scmp.eq.s32.totalorder %s10, 0
      %p72 = por %p70, %p71
      %p73 = scmp.ne.s32.totalorder %s65, %s67
      %p74 = scmp.eq.s32.totalorder %s15, 1
      %p75 = por %p73, %p74
      %p76 = scmp.ne.s32.totalorder %s67, %s68
      %p77 = scmp.eq.s32.totalorder %s15, 0
      %p78 = por %p76, %p77
      %p79 = scmp.ne.s32.totalorder %s67, %s68
      %p80 = scmp.eq.s32.totalorder %s16, 1
      %p81 = por %p79, %p80
      %p83 = scmp.ne.s32.totalorder %s68, %s82
      %p84 = scmp.eq.s32.totalorder %s16, 0
      %p85 = por %p83, %p84
      %s87 = sadd.s32 %s86, 1
      %p90 = scmp.eq.s32.totalorder %s10, 1
      %p91 = scmp.ne.s32.totalorder %s86, %s88
      %p92 = scmp.eq.s32.totalorder %s10, 0
      %p93 = por %p91, %p92
      %p94 = scmp.ne.s32.totalorder %s86, %s88
      %p95 = scmp.eq.s32.totalorder %s15, 1
      %p96 = por %p94, %p95
      %p97 = scmp.ne.s32.totalorder %s88, %s89
      %p98 = scmp.eq.s32.totalorder %s15, 0
      %p99 = por %p97, %p98
      %p100 = scmp.ne.s32.totalorder %s88, %s89
      %p101 = scmp.eq.s32.totalorder %s16, 1
      %p102 = por %p100, %p101
      %p104 = scmp.ne.s32.totalorder %s89, %s103
      %p105 = scmp.eq.s32.totalorder %s16, 0
      %p106 = por %p104, %p105
      %s107 = ssub.s32 %s10, %s17
      %p108 = scmp.eq.s32.totalorder %s107, 0
      %s110 = sadd.s32 %s109, 1
      %s111 = scalar_select %p108, %s109, %s110
      %p114 = pneg %p108
      %p115 = scmp.eq.s32.totalorder %s10, 1
      %p116 = por %p114, %p115
      %p117 = scmp.ne.s32.totalorder %s109, %s112
      %p118 = scmp.eq.s32.totalorder %s10, 0
      %p119 = por %p117, %p118
      %p120 = scmp.ne.s32.totalorder %s109, %s112
      %p121 = scmp.eq.s32.totalorder %s15, 1
      %p122 = por %p120, %p121
      %p123 = scmp.ne.s32.totalorder %s112, %s113
      %p124 = scmp.eq.s32.totalorder %s15, 0
      %p125 = por %p123, %p124
      %p126 = scmp.ne.s32.totalorder %s112, %s113
      %p127 = scmp.eq.s32.totalorder %s16, 1
      %p128 = por %p126, %p127
      %p130 = scmp.ne.s32.totalorder %s113, %s129
      %p131 = scmp.eq.s32.totalorder %s16, 0
      %p132 = por %p130, %p131
      %p133 = scmp.le.s32.totalorder 1, %s10
      %p134 = scmp.lt.s32.totalorder %s10, 3
      %p135 = pnand %p133, %p134
      %p136 = pneg %p135
      // Predicated region
      $region9: #{sdf_network_forward.1} parent=5 // pred_check
        _
      $region10: #{sdf_network_forward.1} parent=5 // pred_check_branch
        %138 = sbr.rel (%p135) target = $region12
      $region11: #{sdf_network_forward.1} parent=5 // pred_region
        %s139 = ssub.s32 %s10, 1
        // Predicated region
        $region13: #{sdf_network_forward.1} parent=11 // pred_check
          %p140 = pneg %p57
        $region14: #{sdf_network_forward.1} parent=11 // pred_check_branch
          %142 = sbr.rel (%p140) target = $region16
        $region15: #{sdf_network_forward.1} parent=11 // pred_region
          _
        $region16: #{sdf_network_forward.1} parent=11 // pred_fallthru
          _
        // Predicated region
        $region17: #{sdf_network_forward.1} parent=11 // pred_check
          %p143 = pneg %p78
        $region18: #{sdf_network_forward.1} parent=11 // pred_check_branch
          %145 = sbr.rel (%p143) target = $region20
        $region19: #{sdf_network_forward.1} parent=11 // pred_region
          _
        $region20: #{sdf_network_forward.1} parent=11 // pred_fallthru
          _
        // Predicated region
        $region21: #{sdf_network_forward.1} parent=11 // pred_check
          %p146 = pneg %p99
        $region22: #{sdf_network_forward.1} parent=11 // pred_check_branch
          %148 = sbr.rel (%p146) target = $region24
        $region23: #{sdf_network_forward.1} parent=11 // pred_region
          _
        $region24: #{sdf_network_forward.1} parent=11 // pred_fallthru
          _
      $region12: #{sdf_network_forward.1} parent=5 // pred_fallthru
        _
      %p149 = scmp.lt.s32.totalorder %s10, 2
      // Predicated region
      $region25: #{sdf_network_forward.1} parent=5 // pred_check
        %p150 = pneg %p149
      $region26: #{sdf_network_forward.1} parent=5 // pred_check_branch
        %152 = sbr.rel (%p150) target = $region28
      $region27: #{sdf_network_forward.1} parent=5 // pred_region
        // Predicated region
        $region29: #{sdf_network_forward.1} parent=27 // pred_check
          %p153 = pneg %p30
        $region30: #{sdf_network_forward.1} parent=27 // pred_check_branch
          %155 = sbr.rel (%p153) target = $region32
        $region31: #{sdf_network_forward.1} parent=27 // pred_region
          %s156 = sand.u32 %s20, 1
          %s157 = sand.u32 %s20, 1
          %s158 = smul.addr %s157, 128
          %s159 = scalar_lea.vmem [#allocation2], %s158
          %s160 = smul.u32 2, %s10
          %s161 = smul.addr %s160, 4
          %s162 = scalar_lea.vmem %s0, %s161
          // Predicated region
          $region33: #{sdf_network_forward.1} parent=31 // pred_check
            _
          $region34: #{sdf_network_forward.1} parent=31 // pred_check_branch
            %164 = sbr.rel (0) target = $region36
          $region35: #{sdf_network_forward.1} parent=31 // pred_region
            // Predicated region
            $region37: #{sdf_network_forward.1} parent=35 // pred_check
              _
            $region38: #{sdf_network_forward.1} parent=35 // pred_check_branch
              %166 = sbr.rel (0) target = $region40
            $region39: #{sdf_network_forward.1} parent=35 // pred_region
              // Predicated region
              $region52: #{sdf_network_forward.1} parent=39 // pred_check
                _
              $region53: #{sdf_network_forward.1} parent=39 // pred_check_branch
                %211 = sbr.rel (0) target = $region55
              $region54: #{sdf_network_forward.1} parent=39 // pred_region
                loop: start=0, step=1, limit=1
                $region56: #{sdf_network_forward.1} parent=54 // loop_pre_header
                  _
                $region57: #{sdf_network_forward.1} parent=54 // loop_header
                  %s213 = sphi 0, %s217
                  %p214 = scmp.ge.s32.totalorder %s213, 1
                  %s218 = sphi %s162, %s162
                  %s219 = sphi %s159, %s159
                $region58: #{sdf_network_forward.1} parent=54 // loop_header_branch
                  %216 = sbr.rel (%p214) target = $region62
                $region59: #{sdf_network_forward.1} parent=54 // loop_body
                  %v220 = vld [vmem:[%s218] sm:$0xff]
                  %221 = vst [vmem:[%s219] sm:$0xff] %v220
                  %v222 = vld [vmem:[%s218 + $0x10] sm:$0xff]
                  %223 = vst [vmem:[%s219 + $0x8] sm:$0xff] %v222
                  %v224 = vld [vmem:[%s218 + $0x20] sm:$0xff]
                  %225 = vst [vmem:[%s219 + $0x10] sm:$0xff] %v224
                  %v226 = vld [vmem:[%s218 + $0x30] sm:$0xff]
                  %227 = vst [vmem:[%s219 + $0x18] sm:$0xff] %v226
                  %v228 = vld [vmem:[%s218 + $0x40] sm:$0xff]
                  %229 = vst [vmem:[%s219 + $0x20] sm:$0xff] %v228
                  %v230 = vld [vmem:[%s218 + $0x50] sm:$0xff]
                  %231 = vst [vmem:[%s219 + $0x28] sm:$0xff] %v230
                  %v232 = vld [vmem:[%s218 + $0x60] sm:$0xff]
                  %233 = vst [vmem:[%s219 + $0x30] sm:$0xff] %v232
                  %v234 = vld [vmem:[%s218 + $0x70] sm:$0xff]
                  %235 = vst [vmem:[%s219 + $0x38] sm:$0xff] %v234
                  %v236 = vld [vmem:[%s218 + $0x80] sm:$0xff]
                  %237 = vst [vmem:[%s219 + $0x40] sm:$0xff] %v236
                  %v238 = vld [vmem:[%s218 + $0x90] sm:$0xff]
                  %239 = vst [vmem:[%s219 + $0x48] sm:$0xff] %v238
                  %v240 = vld [vmem:[%s218 + $0xa0] sm:$0xff]
                  %241 = vst [vmem:[%s219 + $0x50] sm:$0xff] %v240
                  %v242 = vld [vmem:[%s218 + $0xb0] sm:$0xff]
                  %243 = vst [vmem:[%s219 + $0x58] sm:$0xff] %v242
                  %v244 = vld [vmem:[%s218 + $0xc0] sm:$0xff]
                  %245 = vst [vmem:[%s219 + $0x60] sm:$0xff] %v244
                  %v246 = vld [vmem:[%s218 + $0xd0] sm:$0xff]
                  %247 = vst [vmem:[%s219 + $0x68] sm:$0xff] %v246
                  %v248 = vld [vmem:[%s218 + $0xe0] sm:$0xff]
                  %249 = vst [vmem:[%s219 + $0x70] sm:$0xff] %v248
                  %v250 = vld [vmem:[%s218 + $0xf0] sm:$0xff]
                  %251 = vst [vmem:[%s219 + $0x78] sm:$0xff] %v250
                $region60: #{sdf_network_forward.1} parent=54 // loop_footer
                  %s217 = sadd.s32 1, %s213
                $region61: #{sdf_network_forward.1} parent=54 // loop_footer_branch
                  %212 = sbr.rel target = $region57
                $region62: #{sdf_network_forward.1} parent=54 // loop_exit
                  _
              $region55: #{sdf_network_forward.1} parent=39 // pred_fallthru
                _
              // Predicated region
              $region63: #{sdf_network_forward.1} parent=39 // pred_check
                _
              $region64: #{sdf_network_forward.1} parent=39 // pred_check_branch
                %253 = sbr.rel target = $region66
              $region65: #{sdf_network_forward.1} parent=39 // pred_region
                _
              $region66: #{sdf_network_forward.1} parent=39 // pred_fallthru
                _
            $region40: #{sdf_network_forward.1} parent=35 // pred_fallthru
              _
            // Predicated region
            $region41: #{sdf_network_forward.1} parent=35 // pred_check
              _
            $region42: #{sdf_network_forward.1} parent=35 // pred_check_branch
              %168 = sbr.rel target = $region44
            $region43: #{sdf_network_forward.1} parent=35 // pred_region
              loop: start=0, step=1, limit=1
              $region45: #{sdf_network_forward.1} parent=43 // loop_pre_header
                _
              $region46: #{sdf_network_forward.1} parent=43 // loop_header
                %s171 = sphi 0, %s175
                %p172 = scmp.ge.s32.totalorder %s171, 1
                %s176 = sphi %s162, %s162
                %s177 = sphi %s159, %s159
              $region47: #{sdf_network_forward.1} parent=43 // loop_header_branch
                %174 = sbr.rel (%p172) target = $region51
              $region48: #{sdf_network_forward.1} parent=43 // loop_body
                %v178 = vld [vmem:[%s176] sm:$0xff]
                %179 = vst [vmem:[%s177] sm:$0xff] %v178
                %v180 = vld [vmem:[%s176 + $0x10] sm:$0xff]
                %181 = vst [vmem:[%s177 + $0x8] sm:$0xff] %v180
                %v182 = vld [vmem:[%s176 + $0x20] sm:$0xff]
                %183 = vst [vmem:[%s177 + $0x10] sm:$0xff] %v182
                %v184 = vld [vmem:[%s176 + $0x30] sm:$0xff]
                %185 = vst [vmem:[%s177 + $0x18] sm:$0xff] %v184
                %v186 = vld [vmem:[%s176 + $0x40] sm:$0xff]
                %187 = vst [vmem:[%s177 + $0x20] sm:$0xff] %v186
                %v188 = vld [vmem:[%s176 + $0x50] sm:$0xff]
                %189 = vst [vmem:[%s177 + $0x28] sm:$0xff] %v188
                %v190 = vld [vmem:[%s176 + $0x60] sm:$0xff]
                %191 = vst [vmem:[%s177 + $0x30] sm:$0xff] %v190
                %v192 = vld [vmem:[%s176 + $0x70] sm:$0xff]
                %193 = vst [vmem:[%s177 + $0x38] sm:$0xff] %v192
                %v194 = vld [vmem:[%s176 + $0x80] sm:$0xff]
                %195 = vst [vmem:[%s177 + $0x40] sm:$0xff] %v194
                %v196 = vld [vmem:[%s176 + $0x90] sm:$0xff]
                %197 = vst [vmem:[%s177 + $0x48] sm:$0xff] %v196
                %v198 = vld [vmem:[%s176 + $0xa0] sm:$0xff]
                %199 = vst [vmem:[%s177 + $0x50] sm:$0xff] %v198
                %v200 = vld [vmem:[%s176 + $0xb0] sm:$0xff]
                %201 = vst [vmem:[%s177 + $0x58] sm:$0xff] %v200
                %v202 = vld [vmem:[%s176 + $0xc0] sm:$0xff]
                %203 = vst [vmem:[%s177 + $0x60] sm:$0xff] %v202
                %v204 = vld [vmem:[%s176 + $0xd0] sm:$0xff]
                %205 = vst [vmem:[%s177 + $0x68] sm:$0xff] %v204
                %v206 = vld [vmem:[%s176 + $0xe0] sm:$0xff]
                %207 = vst [vmem:[%s177 + $0x70] sm:$0xff] %v206
                %v208 = vld [vmem:[%s176 + $0xf0] sm:$0xff]
                %209 = vst [vmem:[%s177 + $0x78] sm:$0xff] %v208
              $region49: #{sdf_network_forward.1} parent=43 // loop_footer
                %s175 = sadd.s32 1, %s171
              $region50: #{sdf_network_forward.1} parent=43 // loop_footer_branch
                %170 = sbr.rel target = $region46
              $region51: #{sdf_network_forward.1} parent=43 // loop_exit
                _
            $region44: #{sdf_network_forward.1} parent=35 // pred_fallthru
              _
          $region36: #{sdf_network_forward.1} parent=31 // pred_fallthru
            _
          %254 = vnop
        $region32: #{sdf_network_forward.1} parent=27 // pred_fallthru
          _
      $region28: #{sdf_network_forward.1} parent=5 // pred_fallthru
        _
      %p255 = scmp.le.s32.totalorder 1, %s10
      %p256 = scmp.lt.s32.totalorder %s10, 3
      %p257 = pnand %p255, %p256
      %p258 = pneg %p257
      // Predicated region
      $region67: #{sdf_network_forward.1} parent=5 // pred_check
        _
      $region68: #{sdf_network_forward.1} parent=5 // pred_check_branch
        %260 = sbr.rel (%p257) target = $region70
      $region69: #{sdf_network_forward.1} parent=5 // pred_region
        %s261 = ssub.s32 %s10, 1
        %s262 = sand.u32 %s23, 1
        %s263 = sand.u32 %s23, 1
        %s264 = smul.addr %s263, 128
        %s265 = scalar_lea.vmem [#allocation2], %s264
        // Predicated region
        $region71: #{sdf_network_forward.1} parent=69 // pred_check
          %p266 = pneg %p36
        $region72: #{sdf_network_forward.1} parent=69 // pred_check_branch
          %268 = sbr.rel (%p266) target = $region74
        $region73: #{sdf_network_forward.1} parent=69 // pred_region
          _
        $region74: #{sdf_network_forward.1} parent=69 // pred_fallthru
          _
        %s269 = sand.u32 %s23, 1
        %s270 = sand.u32 %s23, 1
        %s271 = smul.addr %s270, 128
        %s272 = scalar_lea.vmem [#allocation2], %s271
        %p273 = pneg %p36
        %p274 = pneg %p33
        %p275 = pneg %p57
        %p276 = pneg %p54
        %p277 = pneg %p78
        %p278 = pneg %p75
        %p279 = pneg %p99
        %p280 = pneg %p96
        %p281 = pneg %p125
        %p282 = pneg %p122
        %s283 = smul.u32 2, %s15
        %p284 = scmp.lt.s32.totalorder %s283, 3
        %s285 = scalar_select %p284, %s283, 3
        %s286 = smul.addr %s285, 4
        %s287 = scalar_lea.vmem %s4, %s286
        %s288 = smul.u32 2, %s15
        %s289 = smul.u32 2, %s15
        %p290 = scmp.lt.s32.totalorder %s289, 3
        %s291 = scalar_select %p290, %s289, 3
        %s292 = smul.addr %s291, 4
        %s293 = scalar_lea.vmem %s4, %s292
        %s294 = smul.u32 2, %s15
        %v296 = vld [vmem:[%s265] sm:$0xff]
        %v297 = vld [vmem:[%s265 + $0x8] sm:$0xff]
        %v298 = vld [vmem:[%s265 + $0x10] sm:$0xff]
        %v299 = vld [vmem:[%s265 + $0x18] sm:$0xff]
        %v300 = vld [vmem:[%s265 + $0x20] sm:$0xff]
        %v301 = vld [vmem:[%s265 + $0x28] sm:$0xff]
        %v302 = vld [vmem:[%s265 + $0x30] sm:$0xff]
        %v303 = vld [vmem:[%s265 + $0x38] sm:$0xff]
        %v304 = vld [vmem:[%s265 + $0x40] sm:$0xff]
        %v305 = vld [vmem:[%s265 + $0x48] sm:$0xff]
        %v306 = vld [vmem:[%s265 + $0x50] sm:$0xff]
        %v307 = vld [vmem:[%s265 + $0x58] sm:$0xff]
        %v308 = vld [vmem:[%s265 + $0x60] sm:$0xff]
        %v309 = vld [vmem:[%s265 + $0x68] sm:$0xff]
        %v310 = vld [vmem:[%s265 + $0x70] sm:$0xff]
        %v311 = vld [vmem:[%s265 + $0x78] sm:$0xff]
        %v312 = vld [vmem:[%s1] sm:$0xf]
        %v313 = vld [vmem:[%s1 + $0x4] sm:$0xf]
        %v314 = vld [vmem:[%s1 + $0x8] sm:$0xf]
        %v315 = vld [vmem:[%s1 + $0xc] sm:$0xf]
        %v316 = vld [vmem:[%s1 + $0x10] sm:$0xf]
        %v317 = vld [vmem:[%s1 + $0x14] sm:$0xf]
        %v318 = vld [vmem:[%s1 + $0x18] sm:$0xf]
        %v319 = vld [vmem:[%s1 + $0x1c] sm:$0xf]
        %v320 = vld [vmem:[%s1 + $0x20] sm:$0xf]
        %v321 = vld [vmem:[%s1 + $0x24] sm:$0xf]
        %v322 = vld [vmem:[%s1 + $0x28] sm:$0xf]
        %v323 = vld [vmem:[%s1 + $0x2c] sm:$0xf]
        %v324 = vld [vmem:[%s1 + $0x30] sm:$0xf]
        %v325 = vld [vmem:[%s1 + $0x34] sm:$0xf]
        %v326 = vld [vmem:[%s1 + $0x38] sm:$0xf]
        %v327 = vld [vmem:[%s1 + $0x3c] sm:$0xf]
        %v328 = vld [vmem:[%s1 + $0x40] sm:$0xf]
        %v329 = vld [vmem:[%s1 + $0x44] sm:$0xf]
        %v330 = vld [vmem:[%s1 + $0x48] sm:$0xf]
        %v331 = vld [vmem:[%s1 + $0x4c] sm:$0xf]
        %v332 = vld [vmem:[%s1 + $0x50] sm:$0xf]
        %v333 = vld [vmem:[%s1 + $0x54] sm:$0xf]
        %v334 = vld [vmem:[%s1 + $0x58] sm:$0xf]
        %v335 = vld [vmem:[%s1 + $0x5c] sm:$0xf]
        %v336 = vld [vmem:[%s1 + $0x60] sm:$0xf]
        %v337 = vld [vmem:[%s1 + $0x64] sm:$0xf]
        %v338 = vld [vmem:[%s1 + $0x68] sm:$0xf]
        %v339 = vld [vmem:[%s1 + $0x6c] sm:$0xf]
        %v340 = vld [vmem:[%s1 + $0x70] sm:$0xf]
        %v341 = vld [vmem:[%s1 + $0x74] sm:$0xf]
        %v342 = vld [vmem:[%s1 + $0x78] sm:$0xf]
        %v343 = vld [vmem:[%s1 + $0x7c] sm:$0xf]
        %v376 = vunpack.c.l.b16 %v312
        %v377 = vunpack.c.l.b16 %v313
        %v378 = vunpack.c.l.b16 %v314
        %v379 = vunpack.c.l.b16 %v315
        %v380 = vunpack.c.l.b16 %v316
        %v381 = vunpack.c.l.b16 %v317
        %v382 = vunpack.c.l.b16 %v318
        %v383 = vunpack.c.l.b16 %v319
        %v384 = vunpack.c.l.b16 %v320
        %v385 = vunpack.c.l.b16 %v321
        %v386 = vunpack.c.l.b16 %v322
        %v387 = vunpack.c.l.b16 %v323
        %v388 = vunpack.c.l.b16 %v324
        %v389 = vunpack.c.l.b16 %v325
        %v390 = vunpack.c.l.b16 %v326
        %v391 = vunpack.c.l.b16 %v327
        %v392 = vunpack.c.l.b16 %v328
        %v393 = vunpack.c.l.b16 %v329
        %v394 = vunpack.c.l.b16 %v330
        %v395 = vunpack.c.l.b16 %v331
        %v396 = vunpack.c.l.b16 %v332
        %v397 = vunpack.c.l.b16 %v333
        %v398 = vunpack.c.l.b16 %v334
        %v399 = vunpack.c.l.b16 %v335
        %v400 = vunpack.c.l.b16 %v336
        %v401 = vunpack.c.l.b16 %v337
        %v402 = vunpack.c.l.b16 %v338
        %v403 = vunpack.c.l.b16 %v339
        %v404 = vunpack.c.l.b16 %v340
        %v405 = vunpack.c.l.b16 %v341
        %v406 = vunpack.c.l.b16 %v342
        %v407 = vunpack.c.l.b16 %v343
        %v408 = vpack.c.b16 %v377, %v376
        %v409 = vpack.c.b16 %v379, %v378
        %v410 = vpack.c.b16 %v381, %v380
        %v411 = vpack.c.b16 %v383, %v382
        %v412 = vpack.c.b16 %v385, %v384
        %v413 = vpack.c.b16 %v387, %v386
        %v414 = vpack.c.b16 %v389, %v388
        %v415 = vpack.c.b16 %v391, %v390
        %v416 = vpack.c.b16 %v393, %v392
        %v417 = vpack.c.b16 %v395, %v394
        %v418 = vpack.c.b16 %v397, %v396
        %v419 = vpack.c.b16 %v399, %v398
        %v420 = vpack.c.b16 %v401, %v400
        %v421 = vpack.c.b16 %v403, %v402
        %v422 = vpack.c.b16 %v405, %v404
        %v423 = vpack.c.b16 %v407, %v406
        %v456 = vunpack.c.l.b16 %v296
        %v457 = vunpack.c.h.b16 %v296
        %v458 = vunpack.c.l.b16 %v297
        %v459 = vunpack.c.h.b16 %v297
        %v460 = vunpack.c.l.b16 %v298
        %v461 = vunpack.c.h.b16 %v298
        %v462 = vunpack.c.l.b16 %v299
        %v463 = vunpack.c.h.b16 %v299
        %v464 = vunpack.c.l.b16 %v300
        %v465 = vunpack.c.h.b16 %v300
        %v466 = vunpack.c.l.b16 %v301
        %v467 = vunpack.c.h.b16 %v301
        %v468 = vunpack.c.l.b16 %v302
        %v469 = vunpack.c.h.b16 %v302
        %v470 = vunpack.c.l.b16 %v303
        %v471 = vunpack.c.h.b16 %v303
        %v472 = vunpack.c.l.b16 %v304
        %v473 = vunpack.c.h.b16 %v304
        %v474 = vunpack.c.l.b16 %v305
        %v475 = vunpack.c.h.b16 %v305
        %v476 = vunpack.c.l.b16 %v306
        %v477 = vunpack.c.h.b16 %v306
        %v478 = vunpack.c.l.b16 %v307
        %v479 = vunpack.c.h.b16 %v307
        %v480 = vunpack.c.l.b16 %v308
        %v481 = vunpack.c.h.b16 %v308
        %v482 = vunpack.c.l.b16 %v309
        %v483 = vunpack.c.h.b16 %v309
        %v484 = vunpack.c.l.b16 %v310
        %v485 = vunpack.c.h.b16 %v310
        %v486 = vunpack.c.l.b16 %v311
        %v487 = vunpack.c.h.b16 %v311
        %v488 = vpack.c.b16 %v458, %v456
        %v489 = vpack.c.b16 %v459, %v457
        %v490 = vpack.c.b16 %v462, %v460
        %v491 = vpack.c.b16 %v463, %v461
        %v492 = vpack.c.b16 %v466, %v464
        %v493 = vpack.c.b16 %v467, %v465
        %v494 = vpack.c.b16 %v470, %v468
        %v495 = vpack.c.b16 %v471, %v469
        %v496 = vpack.c.b16 %v474, %v472
        %v497 = vpack.c.b16 %v475, %v473
        %v498 = vpack.c.b16 %v478, %v476
        %v499 = vpack.c.b16 %v479, %v477
        %v500 = vpack.c.b16 %v482, %v480
        %v501 = vpack.c.b16 %v483, %v481
        %v502 = vpack.c.b16 %v486, %v484
        %v503 = vpack.c.b16 %v487, %v485
        %520 = vmatprep.subr.bf16.mxu0 %v489
        %521 = vmatpush1.bf16.msra.mxu0 %v488
        %522 = vmatprep.subr.bf16.mxu0 %v491
        %523 = vmatpush1.bf16.msra.mxu0 %v490
        %524 = vmatprep.subr.bf16.mxu0 %v493
        %525 = vmatpush1.bf16.msra.mxu0 %v492
        %526 = vmatprep.subr.bf16.mxu0 %v495
        %527 = vmatpush1.bf16.msra.mxu0 %v494
        %528 = vmatprep.subr.bf16.mxu0 %v497
        %529 = vmatpush1.bf16.msra.mxu0 %v496
        %530 = vmatprep.subr.bf16.mxu0 %v499
        %531 = vmatpush1.bf16.msra.mxu0 %v498
        %532 = vmatprep.subr.bf16.mxu0 %v501
        %533 = vmatpush1.bf16.msra.mxu0 %v500
        %534 = vmatprep.subr.bf16.mxu0 %v503
        %535 = vmatpush1.bf16.msra.mxu0 %v502
        %536 = vmatprep.subr.bf16.mxu0 0
        %537 = vmatpush1.bf16.msra.mxu0 0
        %538 = vmatprep.subr.bf16.mxu0 0
        %539 = vmatpush1.bf16.msra.mxu0 0
        %540 = vmatprep.subr.bf16.mxu0 0
        %541 = vmatpush1.bf16.msra.mxu0 0
        %542 = vmatprep.subr.bf16.mxu0 0
        %543 = vmatpush1.bf16.msra.mxu0 0
        %544 = vmatprep.subr.bf16.mxu0 0
        %545 = vmatpush1.bf16.msra.mxu0 0
        %546 = vmatprep.subr.bf16.mxu0 0
        %547 = vmatpush1.bf16.msra.mxu0 0
        %548 = vmatprep.subr.bf16.mxu0 0
        %549 = vmatpush1.bf16.msra.mxu0 0
        %550 = vmatprep.subr.bf16.mxu0 0
        %551 = vmatpush1.bf16.msra.mxu0 0
        %552 = vmatprep.mubr.bf16.mxu0 0
        %553 = vmatmul.mubr.bf16.gmra.mrb[0].mxu0 %v408
        %v554 = vpop.f32.mrb[0].mxu0
        %v555 = vadd.f32 0.0, %v554
        %v556 = vpop.f32.mrb[0].mxu0
        %v557 = vadd.f32 0.0, %v556
        %v558 = vpop.f32.mrb[0].mxu0
        %v559 = vadd.f32 0.0, %v558
        %v560 = vpop.f32.mrb[0].mxu0
        %v561 = vadd.f32 0.0, %v560
        %562 = vmatprep.mubr.bf16.mxu0 0
        %563 = vmatmul.mubr.bf16.gmra.mrb[0].mxu0 %v409
        %v564 = vpop.f32.mrb[0].mxu0
        %v565 = vadd.f32 0.0, %v564
        %v566 = vpop.f32.mrb[0].mxu0
        %v567 = vadd.f32 0.0, %v566
        %v568 = vpop.f32.mrb[0].mxu0
        %v569 = vadd.f32 0.0, %v568
        %v570 = vpop.f32.mrb[0].mxu0
        %v571 = vadd.f32 0.0, %v570
        %572 = vmatprep.mubr.bf16.mxu0 0
        %573 = vmatmul.mubr.bf16.gmra.mrb[0].mxu0 %v410
        %v574 = vpop.f32.mrb[0].mxu0
        %v575 = vadd.f32 0.0, %v574
        %v576 = vpop.f32.mrb[0].mxu0
        %v577 = vadd.f32 0.0, %v576
        %v578 = vpop.f32.mrb[0].mxu0
        %v579 = vadd.f32 0.0, %v578
        %v580 = vpop.f32.mrb[0].mxu0
        %v581 = vadd.f32 0.0, %v580
        %582 = vmatprep.mubr.bf16.mxu0 0
        %583 = vmatmul.mubr.bf16.gmra.mrb[0].mxu0 %v411
        %v584 = vpop.f32.mrb[0].mxu0
        %v585 = vadd.f32 0.0, %v584
        %v586 = vpop.f32.mrb[0].mxu0
        %v587 = vadd.f32 0.0, %v586
        %v588 = vpop.f32.mrb[0].mxu0
        %v589 = vadd.f32 0.0, %v588
        %v590 = vpop.f32.mrb[0].mxu0
        %v591 = vadd.f32 0.0, %v590
        %592 = vmatprep.mubr.bf16.mxu0 0
        %593 = vmatmul.mubr.bf16.gmra.mrb[0].mxu0 %v412
        %v594 = vpop.f32.mrb[0].mxu0
        %v595 = vadd.f32 0.0, %v594
        %v596 = vpop.f32.mrb[0].mxu0
        %v597 = vadd.f32 0.0, %v596
        %v598 = vpop.f32.mrb[0].mxu0
        %v599 = vadd.f32 0.0, %v598
        %v600 = vpop.f32.mrb[0].mxu0
        %v601 = vadd.f32 0.0, %v600
        %602 = vmatprep.mubr.bf16.mxu0 0
        %603 = vmatmul.mubr.bf16.gmra.mrb[0].mxu0 %v413
        %v604 = vpop.f32.mrb[0].mxu0
        %v605 = vadd.f32 0.0, %v604
        %v606 = vpop.f32.mrb[0].mxu0
        %v607 = vadd.f32 0.0, %v606
        %v608 = vpop.f32.mrb[0].mxu0
        %v609 = vadd.f32 0.0, %v608
        %v610 = vpop.f32.mrb[0].mxu0
        %v611 = vadd.f32 0.0, %v610
        %612 = vmatprep.mubr.bf16.mxu0 0
        %613 = vmatmul.mubr.bf16.gmra.mrb[0].mxu0 %v414
        %v614 = vpop.f32.mrb[0].mxu0
        %v615 = vadd.f32 0.0, %v614
        %v616 = vpop.f32.mrb[0].mxu0
        %v617 = vadd.f32 0.0, %v616
        %v618 = vpop.f32.mrb[0].mxu0
        %v619 = vadd.f32 0.0, %v618
        %v620 = vpop.f32.mrb[0].mxu0
        %v621 = vadd.f32 0.0, %v620
        %622 = vmatprep.mubr.bf16.mxu0 0
        %623 = vmatmul.mubr.bf16.gmra.mrb[0].mxu0 %v415
        %v624 = vpop.f32.mrb[0].mxu0
        %v625 = vadd.f32 0.0, %v624
        %v626 = vpop.f32.mrb[0].mxu0
        %v627 = vadd.f32 0.0, %v626
        %v628 = vpop.f32.mrb[0].mxu0
        %v629 = vadd.f32 0.0, %v628
        %v630 = vpop.f32.mrb[0].mxu0
        %v631 = vadd.f32 0.0, %v630
        %632 = vmatprep.mubr.bf16.mxu0 0
        %633 = vmatmul.mubr.bf16.gmra.mrb[0].mxu0 %v416
        %v634 = vpop.f32.mrb[0].mxu0
        %v635 = vadd.f32 0.0, %v634
        %v636 = vpop.f32.mrb[0].mxu0
        %v637 = vadd.f32 0.0, %v636
        %v638 = vpop.f32.mrb[0].mxu0
        %v639 = vadd.f32 0.0, %v638
        %v640 = vpop.f32.mrb[0].mxu0
        %v641 = vadd.f32 0.0, %v640
        %642 = vmatprep.mubr.bf16.mxu0 0
        %643 = vmatmul.mubr.bf16.gmra.mrb[0].mxu0 %v417
        %v644 = vpop.f32.mrb[0].mxu0
        %v645 = vadd.f32 0.0, %v644
        %v646 = vpop.f32.mrb[0].mxu0
        %v647 = vadd.f32 0.0, %v646
        %v648 = vpop.f32.mrb[0].mxu0
        %v649 = vadd.f32 0.0, %v648
        %v650 = vpop.f32.mrb[0].mxu0
        %v651 = vadd.f32 0.0, %v650
        %652 = vmatprep.mubr.bf16.mxu0 0
        %653 = vmatmul.mubr.bf16.gmra.mrb[0].mxu0 %v418
        %v654 = vpop.f32.mrb[0].mxu0
        %v655 = vadd.f32 0.0, %v654
        %v656 = vpop.f32.mrb[0].mxu0
        %v657 = vadd.f32 0.0, %v656
        %v658 = vpop.f32.mrb[0].mxu0
        %v659 = vadd.f32 0.0, %v658
        %v660 = vpop.f32.mrb[0].mxu0
        %v661 = vadd.f32 0.0, %v660
        %662 = vmatprep.mubr.bf16.mxu0 0
        %663 = vmatmul.mubr.bf16.gmra.mrb[0].mxu0 %v419
        %v664 = vpop.f32.mrb[0].mxu0
        %v665 = vadd.f32 0.0, %v664
        %v666 = vpop.f32.mrb[0].mxu0
        %v667 = vadd.f32 0.0, %v666
        %v668 = vpop.f32.mrb[0].mxu0
        %v669 = vadd.f32 0.0, %v668
        %v670 = vpop.f32.mrb[0].mxu0
        %v671 = vadd.f32 0.0, %v670
        %672 = vmatprep.mubr.bf16.mxu0 0
        %673 = vmatmul.mubr.bf16.gmra.mrb[0].mxu0 %v420
        %v674 = vpop.f32.mrb[0].mxu0
        %v675 = vadd.f32 0.0, %v674
        %v676 = vpop.f32.mrb[0].mxu0
        %v677 = vadd.f32 0.0, %v676
        %v678 = vpop.f32.mrb[0].mxu0
        %v679 = vadd.f32 0.0, %v678
        %v680 = vpop.f32.mrb[0].mxu0
        %v681 = vadd.f32 0.0, %v680
        %682 = vmatprep.mubr.bf16.mxu0 0
        %683 = vmatmul.mubr.bf16.gmra.mrb[0].mxu0 %v421
        %v684 = vpop.f32.mrb[0].mxu0
        %v685 = vadd.f32 0.0, %v684
        %v686 = vpop.f32.mrb[0].mxu0
        %v687 = vadd.f32 0.0, %v686
        %v688 = vpop.f32.mrb[0].mxu0
        %v689 = vadd.f32 0.0, %v688
        %v690 = vpop.f32.mrb[0].mxu0
        %v691 = vadd.f32 0.0, %v690
        %692 = vmatprep.mubr.bf16.mxu0 0
        %693 = vmatmul.mubr.bf16.gmra.mrb[0].mxu0 %v422
        %v694 = vpop.f32.mrb[0].mxu0
        %v695 = vadd.f32 0.0, %v694
        %v696 = vpop.f32.mrb[0].mxu0
        %v697 = vadd.f32 0.0, %v696
        %v698 = vpop.f32.mrb[0].mxu0
        %v699 = vadd.f32 0.0, %v698
        %v700 = vpop.f32.mrb[0].mxu0
        %v701 = vadd.f32 0.0, %v700
        %702 = vmatprep.mubr.bf16.mxu0 0
        %703 = vmatmul.mubr.bf16.gmra.mrb[0].mxu0 %v423
        %v704 = vpop.f32.mrb[0].mxu0
        %v705 = vadd.f32 0.0, %v704
        %v706 = vpop.f32.mrb[0].mxu0
        %v707 = vadd.f32 0.0, %v706
        %v708 = vpop.f32.mrb[0].mxu0
        %v709 = vadd.f32 0.0, %v708
        %v710 = vpop.f32.mrb[0].mxu0
        %v711 = vadd.f32 0.0, %v710
        %712 = vdwg.mxu0
        %v713 = vpack.c.bf16 %v559, %v555
        %v714 = vpack.c.bf16 %v561, %v557
        %v715 = vpack.c.bf16 %v569, %v565
        %v716 = vpack.c.bf16 %v571, %v567
        %v717 = vpack.c.bf16 %v579, %v575
        %v718 = vpack.c.bf16 %v581, %v577
        %v719 = vpack.c.bf16 %v589, %v585
        %v720 = vpack.c.bf16 %v591, %v587
        %v721 = vpack.c.bf16 %v599, %v595
        %v722 = vpack.c.bf16 %v601, %v597
        %v723 = vpack.c.bf16 %v609, %v605
        %v724 = vpack.c.bf16 %v611, %v607
        %v725 = vpack.c.bf16 %v619, %v615
        %v726 = vpack.c.bf16 %v621, %v617
        %v727 = vpack.c.bf16 %v629, %v625
        %v728 = vpack.c.bf16 %v631, %v627
        %v729 = vpack.c.bf16 %v639, %v635
        %v730 = vpack.c.bf16 %v641, %v637
        %v731 = vpack.c.bf16 %v649, %v645
        %v732 = vpack.c.bf16 %v651, %v647
        %v733 = vpack.c.bf16 %v659, %v655
        %v734 = vpack.c.bf16 %v661, %v657
        %v735 = vpack.c.bf16 %v669, %v665
        %v736 = vpack.c.bf16 %v671, %v667
        %v737 = vpack.c.bf16 %v679, %v675
        %v738 = vpack.c.bf16 %v681, %v677
        %v739 = vpack.c.bf16 %v689, %v685
        %v740 = vpack.c.bf16 %v691, %v687
        %v741 = vpack.c.bf16 %v699, %v695
        %v742 = vpack.c.bf16 %v701, %v697
        %v743 = vpack.c.bf16 %v709, %v705
        %v744 = vpack.c.bf16 %v711, %v707
        %v745 = vmax.bf16 %v713, 0
        %v746 = vmax.bf16 %v714, 0
        %v747 = vmax.bf16 %v715, 0
        %v748 = vmax.bf16 %v716, 0
        %v749 = vmax.bf16 %v717, 0
        %v750 = vmax.bf16 %v718, 0
        %v751 = vmax.bf16 %v719, 0
        %v752 = vmax.bf16 %v720, 0
        %v753 = vmax.bf16 %v721, 0
        %v754 = vmax.bf16 %v722, 0
        %v755 = vmax.bf16 %v723, 0
        %v756 = vmax.bf16 %v724, 0
        %v757 = vmax.bf16 %v725, 0
        %v758 = vmax.bf16 %v726, 0
        %v759 = vmax.bf16 %v727, 0
        %v760 = vmax.bf16 %v728, 0
        %v761 = vmax.bf16 %v729, 0
        %v762 = vmax.bf16 %v730, 0
        %v763 = vmax.bf16 %v731, 0
        %v764 = vmax.bf16 %v732, 0
        %v765 = vmax.bf16 %v733, 0
        %v766 = vmax.bf16 %v734, 0
        %v767 = vmax.bf16 %v735, 0
        %v768 = vmax.bf16 %v736, 0
        %v769 = vmax.bf16 %v737, 0
        %v770 = vmax.bf16 %v738, 0
        %v771 = vmax.bf16 %v739, 0
        %v772 = vmax.bf16 %v740, 0
        %v773 = vmax.bf16 %v741, 0
        %v774 = vmax.bf16 %v742, 0
        %v775 = vmax.bf16 %v743, 0
        %v776 = vmax.bf16 %v744, 0
        %v777 = vld [vmem:[%s2] sm:$0xff]
        %v778 = vld [vmem:[%s2 + $0x8] sm:$0xff]
        %v779 = vld [vmem:[%s2 + $0x10] sm:$0xff]
        %v780 = vld [vmem:[%s2 + $0x18] sm:$0xff]
        %v781 = vld [vmem:[%s2 + $0x20] sm:$0xff]
        %v782 = vld [vmem:[%s2 + $0x28] sm:$0xff]
        %v783 = vld [vmem:[%s2 + $0x30] sm:$0xff]
        %v784 = vld [vmem:[%s2 + $0x38] sm:$0xff]
        %v785 = vld [vmem:[%s2 + $0x40] sm:$0xff]
        %v786 = vld [vmem:[%s2 + $0x48] sm:$0xff]
        %v787 = vld [vmem:[%s2 + $0x50] sm:$0xff]
        %v788 = vld [vmem:[%s2 + $0x58] sm:$0xff]
        %v789 = vld [vmem:[%s2 + $0x60] sm:$0xff]
        %v790 = vld [vmem:[%s2 + $0x68] sm:$0xff]
        %v791 = vld [vmem:[%s2 + $0x70] sm:$0xff]
        %v792 = vld [vmem:[%s2 + $0x78] sm:$0xff]
        %v793 = vld [vmem:[%s2 + $0x80] sm:$0xff]
        %v794 = vld [vmem:[%s2 + $0x88] sm:$0xff]
        %v795 = vld [vmem:[%s2 + $0x90] sm:$0xff]
        %v796 = vld [vmem:[%s2 + $0x98] sm:$0xff]
        %v797 = vld [vmem:[%s2 + $0xa0] sm:$0xff]
        %v798 = vld [vmem:[%s2 + $0xa8] sm:$0xff]
        %v799 = vld [vmem:[%s2 + $0xb0] sm:$0xff]
        %v800 = vld [vmem:[%s2 + $0xb8] sm:$0xff]
        %v801 = vld [vmem:[%s2 + $0xc0] sm:$0xff]
        %v802 = vld [vmem:[%s2 + $0xc8] sm:$0xff]
        %v803 = vld [vmem:[%s2 + $0xd0] sm:$0xff]
        %v804 = vld [vmem:[%s2 + $0xd8] sm:$0xff]
        %v805 = vld [vmem:[%s2 + $0xe0] sm:$0xff]
        %v806 = vld [vmem:[%s2 + $0xe8] sm:$0xff]
        %v807 = vld [vmem:[%s2 + $0xf0] sm:$0xff]
        %v808 = vld [vmem:[%s2 + $0xf8] sm:$0xff]
        %v841 = vunpack.c.l.b16 %v777
        %v842 = vunpack.c.h.b16 %v777
        %v843 = vunpack.c.l.b16 %v778
        %v844 = vunpack.c.h.b16 %v778
        %v845 = vunpack.c.l.b16 %v779
        %v846 = vunpack.c.h.b16 %v779
        %v847 = vunpack.c.l.b16 %v780
        %v848 = vunpack.c.h.b16 %v780
        %v849 = vunpack.c.l.b16 %v781
        %v850 = vunpack.c.h.b16 %v781
        %v851 = vunpack.c.l.b16 %v782
        %v852 = vunpack.c.h.b16 %v782
        %v853 = vunpack.c.l.b16 %v783
        %v854 = vunpack.c.h.b16 %v783
        %v855 = vunpack.c.l.b16 %v784
        %v856 = vunpack.c.h.b16 %v784
        %v857 = vunpack.c.l.b16 %v785
        %v858 = vunpack.c.h.b16 %v785
        %v859 = vunpack.c.l.b16 %v786
        %v860 = vunpack.c.h.b16 %v786
        %v861 = vunpack.c.l.b16 %v787
        %v862 = vunpack.c.h.b16 %v787
        %v863 = vunpack.c.l.b16 %v788
        %v864 = vunpack.c.h.b16 %v788
        %v865 = vunpack.c.l.b16 %v789
        %v866 = vunpack.c.h.b16 %v789
        %v867 = vunpack.c.l.b16 %v790
        %v868 = vunpack.c.h.b16 %v790
        %v869 = vunpack.c.l.b16 %v791
        %v870 = vunpack.c.h.b16 %v791
        %v871 = vunpack.c.l.b16 %v792
        %v872 = vunpack.c.h.b16 %v792
        %v873 = vunpack.c.l.b16 %v793
        %v874 = vunpack.c.h.b16 %v793
        %v875 = vunpack.c.l.b16 %v794
        %v876 = vunpack.c.h.b16 %v794
        %v877 = vunpack.c.l.b16 %v795
        %v878 = vunpack.c.h.b16 %v795
        %v879 = vunpack.c.l.b16 %v796
        %v880 = vunpack.c.h.b16 %v796
        %v881 = vunpack.c.l.b16 %v797
        %v882 = vunpack.c.h.b16 %v797
        %v883 = vunpack.c.l.b16 %v798
        %v884 = vunpack.c.h.b16 %v798
        %v885 = vunpack.c.l.b16 %v799
        %v886 = vunpack.c.h.b16 %v799
        %v887 = vunpack.c.l.b16 %v800
        %v888 = vunpack.c.h.b16 %v800
        %v889 = vunpack.c.l.b16 %v801
        %v890 = vunpack.c.h.b16 %v801
        %v891 = vunpack.c.l.b16 %v802
        %v892 = vunpack.c.h.b16 %v802
        %v893 = vunpack.c.l.b16 %v803
        %v894 = vunpack.c.h.b16 %v803
        %v895 = vunpack.c.l.b16 %v804
        %v896 = vunpack.c.h.b16 %v804
        %v897 = vunpack.c.l.b16 %v805
        %v898 = vunpack.c.h.b16 %v805
        %v899 = vunpack.c.l.b16 %v806
        %v900 = vunpack.c.h.b16 %v806
        %v901 = vunpack.c.l.b16 %v807
        %v902 = vunpack.c.h.b16 %v807
        %v903 = vunpack.c.l.b16 %v808
        %v904 = vunpack.c.h.b16 %v808
        %v905 = vpack.c.b16 %v843, %v841
        %v906 = vpack.c.b16 %v844, %v842
        %v907 = vpack.c.b16 %v847, %v845
        %v908 = vpack.c.b16 %v848, %v846
        %v909 = vpack.c.b16 %v851, %v849
        %v910 = vpack.c.b16 %v852, %v850
        %v911 = vpack.c.b16 %v855, %v853
        %v912 = vpack.c.b16 %v856, %v854
        %v913 = vpack.c.b16 %v859, %v857
        %v914 = vpack.c.b16 %v860, %v858
        %v915 = vpack.c.b16 %v863, %v861
        %v916 = vpack.c.b16 %v864, %v862
        %v917 = vpack.c.b16 %v867, %v865
        %v918 = vpack.c.b16 %v868, %v866
        %v919 = vpack.c.b16 %v871, %v869
        %v920 = vpack.c.b16 %v872, %v870
        %v921 = vpack.c.b16 %v875, %v873
        %v922 = vpack.c.b16 %v876, %v874
        %v923 = vpack.c.b16 %v879, %v877
        %v924 = vpack.c.b16 %v880, %v878
        %v925 = vpack.c.b16 %v883, %v881
        %v926 = vpack.c.b16 %v884, %v882
        %v927 = vpack.c.b16 %v887, %v885
        %v928 = vpack.c.b16 %v888, %v886
        %v929 = vpack.c.b16 %v891, %v889
        %v930 = vpack.c.b16 %v892, %v890
        %v931 = vpack.c.b16 %v895, %v893
        %v932 = vpack.c.b16 %v896, %v894
        %v933 = vpack.c.b16 %v899, %v897
        %v934 = vpack.c.b16 %v900, %v898
        %v935 = vpack.c.b16 %v903, %v901
        %v936 = vpack.c.b16 %v904, %v902
        %969 = vmatprep.subr.bf16.mxu0 %v746
        %970 = vmatpush1.bf16.msra.mxu0 %v745
        %971 = vmatprep.subr.bf16.mxu0 %v748
        %972 = vmatpush1.bf16.msra.mxu0 %v747
        %973 = vmatprep.subr.bf16.mxu0 %v750
        %974 = vmatpush1.bf16.msra.mxu0 %v749
        %975 = vmatprep.subr.bf16.mxu0 %v752
        %976 = vmatpush1.bf16.msra.mxu0 %v751
        %977 = vmatprep.subr.bf16.mxu0 %v754
        %978 = vmatpush1.bf16.msra.mxu0 %v753
        %979 = vmatprep.subr.bf16.mxu0 %v756
        %980 = vmatpush1.bf16.msra.mxu0 %v755
        %981 = vmatprep.subr.bf16.mxu0 %v758
        %982 = vmatpush1.bf16.msra.mxu0 %v757
        %983 = vmatprep.subr.bf16.mxu0 %v760
        %984 = vmatpush1.bf16.msra.mxu0 %v759
        %985 = vmatprep.subr.bf16.mxu0 %v762
        %986 = vmatpush1.bf16.msra.mxu0 %v761
        %987 = vmatprep.subr.bf16.mxu0 %v764
        %988 = vmatpush1.bf16.msra.mxu0 %v763
        %989 = vmatprep.subr.bf16.mxu0 %v766
        %990 = vmatpush1.bf16.msra.mxu0 %v765
        %991 = vmatprep.subr.bf16.mxu0 %v768
        %992 = vmatpush1.bf16.msra.mxu0 %v767
        %993 = vmatprep.subr.bf16.mxu0 %v770
        %994 = vmatpush1.bf16.msra.mxu0 %v769
        %995 = vmatprep.subr.bf16.mxu0 %v772
        %996 = vmatpush1.bf16.msra.mxu0 %v771
        %997 = vmatprep.subr.bf16.mxu0 %v774
        %998 = vmatpush1.bf16.msra.mxu0 %v773
        %999 = vmatprep.subr.bf16.mxu0 %v776
        %1000 = vmatpush1.bf16.msra.mxu0 %v775
        %1001 = vmatprep.mubr.bf16.mxu0 %v906
        %1002 = vmatmul.mubr.bf16.gmra.mrb[0].mxu0 %v905
        %v1003 = vpop.f32.mrb[0].mxu0
        %v1004 = vadd.f32 0.0, %v1003
        %v1005 = vpop.f32.mrb[0].mxu0
        %v1006 = vadd.f32 0.0, %v1005
        %v1007 = vpop.f32.mrb[0].mxu0
        %v1008 = vadd.f32 0.0, %v1007
        %v1009 = vpop.f32.mrb[0].mxu0
        %v1010 = vadd.f32 0.0, %v1009
        %1011 = vmatprep.mubr.bf16.mxu0 %v908
        %1012 = vmatmul.mubr.bf16.gmra.mrb[0].mxu0 %v907
        %v1013 = vpop.f32.mrb[0].mxu0
        %v1014 = vadd.f32 0.0, %v1013
        %v1015 = vpop.f32.mrb[0].mxu0
        %v1016 = vadd.f32 0.0, %v1015
        %v1017 = vpop.f32.mrb[0].mxu0
        %v1018 = vadd.f32 0.0, %v1017
        %v1019 = vpop.f32.mrb[0].mxu0
        %v1020 = vadd.f32 0.0, %v1019
        %1021 = vmatprep.mubr.bf16.mxu0 %v910
        %1022 = vmatmul.mubr.bf16.gmra.mrb[0].mxu0 %v909
        %v1023 = vpop.f32.mrb[0].mxu0
        %v1024 = vadd.f32 0.0, %v1023
        %v1025 = vpop.f32.mrb[0].mxu0
        %v1026 = vadd.f32 0.0, %v1025
        %v1027 = vpop.f32.mrb[0].mxu0
        %v1028 = vadd.f32 0.0, %v1027
        %v1029 = vpop.f32.mrb[0].mxu0
        %v1030 = vadd.f32 0.0, %v1029
        %1031 = vmatprep.mubr.bf16.mxu0 %v912
        %1032 = vmatmul.mubr.bf16.gmra.mrb[0].mxu0 %v911
        %v1033 = vpop.f32.mrb[0].mxu0
        %v1034 = vadd.f32 0.0, %v1033
        %v1035 = vpop.f32.mrb[0].mxu0
        %v1036 = vadd.f32 0.0, %v1035
        %v1037 = vpop.f32.mrb[0].mxu0
        %v1038 = vadd.f32 0.0, %v1037
        %v1039 = vpop.f32.mrb[0].mxu0
        %v1040 = vadd.f32 0.0, %v1039
        %1041 = vmatprep.mubr.bf16.mxu0 %v914
        %1042 = vmatmul.mubr.bf16.gmra.mrb[0].mxu0 %v913
        %v1043 = vpop.f32.mrb[0].mxu0
        %v1044 = vadd.f32 0.0, %v1043
        %v1045 = vpop.f32.mrb[0].mxu0
        %v1046 = vadd.f32 0.0, %v1045
        %v1047 = vpop.f32.mrb[0].mxu0
        %v1048 = vadd.f32 0.0, %v1047
        %v1049 = vpop.f32.mrb[0].mxu0
        %v1050 = vadd.f32 0.0, %v1049
        %1051 = vmatprep.mubr.bf16.mxu0 %v916
        %1052 = vmatmul.mubr.bf16.gmra.mrb[0].mxu0 %v915
        %v1053 = vpop.f32.mrb[0].mxu0
        %v1054 = vadd.f32 0.0, %v1053
        %v1055 = vpop.f32.mrb[0].mxu0
        %v1056 = vadd.f32 0.0, %v1055
        %v1057 = vpop.f32.mrb[0].mxu0
        %v1058 = vadd.f32 0.0, %v1057
        %v1059 = vpop.f32.mrb[0].mxu0
        %v1060 = vadd.f32 0.0, %v1059
        %1061 = vmatprep.mubr.bf16.mxu0 %v918
        %1062 = vmatmul.mubr.bf16.gmra.mrb[0].mxu0 %v917
        %v1063 = vpop.f32.mrb[0].mxu0
        %v1064 = vadd.f32 0.0, %v1063
        %v1065 = vpop.f32.mrb[0].mxu0
        %v1066 = vadd.f32 0.0, %v1065
        %v1067 = vpop.f32.mrb[0].mxu0
        %v1068 = vadd.f32 0.0, %v1067
        %v1069 = vpop.f32.mrb[0].mxu0
        %v1070 = vadd.f32 0.0, %v1069
        %1071 = vmatprep.mubr.bf16.mxu0 %v920
        %1072 = vmatmul.mubr.bf16.gmra.mrb[0].mxu0 %v919
        %v1073 = vpop.f32.mrb[0].mxu0
        %v1074 = vadd.f32 0.0, %v1073
        %v1075 = vpop.f32.mrb[0].mxu0
        %v1076 = vadd.f32 0.0, %v1075
        %v1077 = vpop.f32.mrb[0].mxu0
        %v1078 = vadd.f32 0.0, %v1077
        %v1079 = vpop.f32.mrb[0].mxu0
        %v1080 = vadd.f32 0.0, %v1079
        %1081 = vmatprep.mubr.bf16.mxu0 %v922
        %1082 = vmatmul.mubr.bf16.gmra.mrb[0].mxu0 %v921
        %v1083 = vpop.f32.mrb[0].mxu0
        %v1084 = vadd.f32 0.0, %v1083
        %v1085 = vpop.f32.mrb[0].mxu0
        %v1086 = vadd.f32 0.0, %v1085
        %v1087 = vpop.f32.mrb[0].mxu0
        %v1088 = vadd.f32 0.0, %v1087
        %v1089 = vpop.f32.mrb[0].mxu0
        %v1090 = vadd.f32 0.0, %v1089
        %1091 = vmatprep.mubr.bf16.mxu0 %v924
        %1092 = vmatmul.mubr.bf16.gmra.mrb[0].mxu0 %v923
        %v1093 = vpop.f32.mrb[0].mxu0
        %v1094 = vadd.f32 0.0, %v1093
        %v1095 = vpop.f32.mrb[0].mxu0
        %v1096 = vadd.f32 0.0, %v1095
        %v1097 = vpop.f32.mrb[0].mxu0
        %v1098 = vadd.f32 0.0, %v1097
        %v1099 = vpop.f32.mrb[0].mxu0
        %v1100 = vadd.f32 0.0, %v1099
        %1101 = vmatprep.mubr.bf16.mxu0 %v926
        %1102 = vmatmul.mubr.bf16.gmra.mrb[0].mxu0 %v925
        %v1103 = vpop.f32.mrb[0].mxu0
        %v1104 = vadd.f32 0.0, %v1103
        %v1105 = vpop.f32.mrb[0].mxu0
        %v1106 = vadd.f32 0.0, %v1105
        %v1107 = vpop.f32.mrb[0].mxu0
        %v1108 = vadd.f32 0.0, %v1107
        %v1109 = vpop.f32.mrb[0].mxu0
        %v1110 = vadd.f32 0.0, %v1109
        %1111 = vmatprep.mubr.bf16.mxu0 %v928
        %1112 = vmatmul.mubr.bf16.gmra.mrb[0].mxu0 %v927
        %v1113 = vpop.f32.mrb[0].mxu0
        %v1114 = vadd.f32 0.0, %v1113
        %v1115 = vpop.f32.mrb[0].mxu0
        %v1116 = vadd.f32 0.0, %v1115
        %v1117 = vpop.f32.mrb[0].mxu0
        %v1118 = vadd.f32 0.0, %v1117
        %v1119 = vpop.f32.mrb[0].mxu0
        %v1120 = vadd.f32 0.0, %v1119
        %1121 = vmatprep.mubr.bf16.mxu0 %v930
        %1122 = vmatmul.mubr.bf16.gmra.mrb[0].mxu0 %v929
        %v1123 = vpop.f32.mrb[0].mxu0
        %v1124 = vadd.f32 0.0, %v1123
        %v1125 = vpop.f32.mrb[0].mxu0
        %v1126 = vadd.f32 0.0, %v1125
        %v1127 = vpop.f32.mrb[0].mxu0
        %v1128 = vadd.f32 0.0, %v1127
        %v1129 = vpop.f32.mrb[0].mxu0
        %v1130 = vadd.f32 0.0, %v1129
        %1131 = vmatprep.mubr.bf16.mxu0 %v932
        %1132 = vmatmul.mubr.bf16.gmra.mrb[0].mxu0 %v931
        %v1133 = vpop.f32.mrb[0].mxu0
        %v1134 = vadd.f32 0.0, %v1133
        %v1135 = vpop.f32.mrb[0].mxu0
        %v1136 = vadd.f32 0.0, %v1135
        %v1137 = vpop.f32.mrb[0].mxu0
        %v1138 = vadd.f32 0.0, %v1137
        %v1139 = vpop.f32.mrb[0].mxu0
        %v1140 = vadd.f32 0.0, %v1139
        %1141 = vmatprep.mubr.bf16.mxu0 %v934
        %1142 = vmatmul.mubr.bf16.gmra.mrb[0].mxu0 %v933
        %v1143 = vpop.f32.mrb[0].mxu0
        %v1144 = vadd.f32 0.0, %v1143
        %v1145 = vpop.f32.mrb[0].mxu0
        %v1146 = vadd.f32 0.0, %v1145
        %v1147 = vpop.f32.mrb[0].mxu0
        %v1148 = vadd.f32 0.0, %v1147
        %v1149 = vpop.f32.mrb[0].mxu0
        %v1150 = vadd.f32 0.0, %v1149
        %1151 = vmatprep.mubr.bf16.mxu0 %v936
        %1152 = vmatmul.mubr.bf16.gmra.mrb[0].mxu0 %v935
        %v1153 = vpop.f32.mrb[0].mxu0
        %v1154 = vadd.f32 0.0, %v1153
        %v1155 = vpop.f32.mrb[0].mxu0
        %v1156 = vadd.f32 0.0, %v1155
        %v1157 = vpop.f32.mrb[0].mxu0
        %v1158 = vadd.f32 0.0, %v1157
        %v1159 = vpop.f32.mrb[0].mxu0
        %v1160 = vadd.f32 0.0, %v1159
        %1161 = vdwg.mxu0
        %v1162 = vmax.f32 %v1004, 0.0
        %v1163 = vmax.f32 %v1006, 0.0
        %v1164 = vmax.f32 %v1008, 0.0
        %v1165 = vmax.f32 %v1010, 0.0
        %v1166 = vmax.f32 %v1014, 0.0
        %v1167 = vmax.f32 %v1016, 0.0
        %v1168 = vmax.f32 %v1018, 0.0
        %v1169 = vmax.f32 %v1020, 0.0
        %v1170 = vmax.f32 %v1024, 0.0
        %v1171 = vmax.f32 %v1026, 0.0
        %v1172 = vmax.f32 %v1028, 0.0
        %v1173 = vmax.f32 %v1030, 0.0
        %v1174 = vmax.f32 %v1034, 0.0
        %v1175 = vmax.f32 %v1036, 0.0
        %v1176 = vmax.f32 %v1038, 0.0
        %v1177 = vmax.f32 %v1040, 0.0
        %v1178 = vmax.f32 %v1044, 0.0
        %v1179 = vmax.f32 %v1046, 0.0
        %v1180 = vmax.f32 %v1048, 0.0
        %v1181 = vmax.f32 %v1050, 0.0
        %v1182 = vmax.f32 %v1054, 0.0
        %v1183 = vmax.f32 %v1056, 0.0
        %v1184 = vmax.f32 %v1058, 0.0
        %v1185 = vmax.f32 %v1060, 0.0
        %v1186 = vmax.f32 %v1064, 0.0
        %v1187 = vmax.f32 %v1066, 0.0
        %v1188 = vmax.f32 %v1068, 0.0
        %v1189 = vmax.f32 %v1070, 0.0
        %v1190 = vmax.f32 %v1074, 0.0
        %v1191 = vmax.f32 %v1076, 0.0
        %v1192 = vmax.f32 %v1078, 0.0
        %v1193 = vmax.f32 %v1080, 0.0
        %v1194 = vmax.f32 %v1084, 0.0
        %v1195 = vmax.f32 %v1086, 0.0
        %v1196 = vmax.f32 %v1088, 0.0
        %v1197 = vmax.f32 %v1090, 0.0
        %v1198 = vmax.f32 %v1094, 0.0
        %v1199 = vmax.f32 %v1096, 0.0
        %v1200 = vmax.f32 %v1098, 0.0
        %v1201 = vmax.f32 %v1100, 0.0
        %v1202 = vmax.f32 %v1104, 0.0
        %v1203 = vmax.f32 %v1106, 0.0
        %v1204 = vmax.f32 %v1108, 0.0
        %v1205 = vmax.f32 %v1110, 0.0
        %v1206 = vmax.f32 %v1114, 0.0
        %v1207 = vmax.f32 %v1116, 0.0
        %v1208 = vmax.f32 %v1118, 0.0
        %v1209 = vmax.f32 %v1120, 0.0
        %v1210 = vmax.f32 %v1124, 0.0
        %v1211 = vmax.f32 %v1126, 0.0
        %v1212 = vmax.f32 %v1128, 0.0
        %v1213 = vmax.f32 %v1130, 0.0
        %v1214 = vmax.f32 %v1134, 0.0
        %v1215 = vmax.f32 %v1136, 0.0
        %v1216 = vmax.f32 %v1138, 0.0
        %v1217 = vmax.f32 %v1140, 0.0
        %v1218 = vmax.f32 %v1144, 0.0
        %v1219 = vmax.f32 %v1146, 0.0
        %v1220 = vmax.f32 %v1148, 0.0
        %v1221 = vmax.f32 %v1150, 0.0
        %v1222 = vmax.f32 %v1154, 0.0
        %v1223 = vmax.f32 %v1156, 0.0
        %v1224 = vmax.f32 %v1158, 0.0
        %v1225 = vmax.f32 %v1160, 0.0
        %v1226 = vld [vmem:[%s3] sm:$0xf]
        %v1227 = vld [vmem:[%s3 + $0x4] sm:$0xf]
        %v1228 = vld [vmem:[%s3 + $0x8] sm:$0xf]
        %v1229 = vld [vmem:[%s3 + $0xc] sm:$0xf]
        %v1230 = vld [vmem:[%s3 + $0x10] sm:$0xf]
        %v1231 = vld [vmem:[%s3 + $0x14] sm:$0xf]
        %v1232 = vld [vmem:[%s3 + $0x18] sm:$0xf]
        %v1233 = vld [vmem:[%s3 + $0x1c] sm:$0xf]
        %v1234 = vunpack.c.l.bf16 %v1226
        %v1235 = vunpack.c.l.bf16 %v1227
        %v1236 = vunpack.c.l.bf16 %v1228
        %v1237 = vunpack.c.l.bf16 %v1229
        %v1238 = vunpack.c.l.bf16 %v1230
        %v1239 = vunpack.c.l.bf16 %v1231
        %v1240 = vunpack.c.l.bf16 %v1232
        %v1241 = vunpack.c.l.bf16 %v1233
        %1243 = vset.pattern.permute.xlu0 0
        %1244 = vperm.xlu0 %1243, %v1234
        %v1245 = vpop.permute.xlu0 %1244
        %1248 = vset.pattern.permute.xlu0 0
        %1249 = vperm.xlu0 %1248, %v1235
        %v1250 = vpop.permute.xlu0 %1249
        %1253 = vset.pattern.permute.xlu0 0
        %1254 = vperm.xlu0 %1253, %v1236
        %v1255 = vpop.permute.xlu0 %1254
        %1258 = vset.pattern.permute.xlu0 0
        %1259 = vperm.xlu0 %1258, %v1237
        %v1260 = vpop.permute.xlu0 %1259
        %1263 = vset.pattern.permute.xlu0 0
        %1264 = vperm.xlu0 %1263, %v1238
        %v1265 = vpop.permute.xlu0 %1264
        %1268 = vset.pattern.permute.xlu0 0
        %1269 = vperm.xlu0 %1268, %v1239
        %v1270 = vpop.permute.xlu0 %1269
        %1273 = vset.pattern.permute.xlu0 0
        %1274 = vperm.xlu0 %1273, %v1240
        %v1275 = vpop.permute.xlu0 %1274
        %1278 = vset.pattern.permute.xlu0 0
        %1279 = vperm.xlu0 %1278, %v1241
        %v1280 = vpop.permute.xlu0 %1279
        %v1282 = vmul.f32 %v1162, %v1245
        %v1283 = vmul.f32 %v1163, %v1245
        %v1284 = vmul.f32 %v1164, %v1250
        %v1285 = vmul.f32 %v1165, %v1250
        %v1286 = vmul.f32 %v1166, %v1255
        %v1287 = vmul.f32 %v1167, %v1255
        %v1288 = vmul.f32 %v1168, %v1260
        %v1289 = vmul.f32 %v1169, %v1260
        %v1290 = vmul.f32 %v1170, %v1265
        %v1291 = vmul.f32 %v1171, %v1265
        %v1292 = vmul.f32 %v1172, %v1270
        %v1293 = vmul.f32 %v1173, %v1270
        %v1294 = vmul.f32 %v1174, %v1275
        %v1295 = vmul.f32 %v1175, %v1275
        %v1296 = vmul.f32 %v1176, %v1280
        %v1297 = vmul.f32 %v1177, %v1280
        %v1298 = vadd.f32 %v1282, %v1284
        %v1299 = vadd.f32 %v1298, %v1286
        %v1300 = vadd.f32 %v1299, %v1288
        %v1301 = vadd.f32 %v1300, %v1290
        %v1302 = vadd.f32 %v1301, %v1292
        %v1303 = vadd.f32 %v1302, %v1294
        %v1304 = vadd.f32 %v1303, %v1296
        %v1305 = vrot.slane %v1304, 4
        %v1306 = vadd.f32 %v1304, %v1305
        %v1307 = vrot.slane %v1306, 2
        %v1308 = vadd.f32 %v1306, %v1307
        %v1309 = vrot.slane %v1308, 1
        %v1310 = vadd.f32 %v1308, %v1309
        %v1311 = vadd.f32 %v1283, %v1285
        %v1312 = vadd.f32 %v1311, %v1287
        %v1313 = vadd.f32 %v1312, %v1289
        %v1314 = vadd.f32 %v1313, %v1291
        %v1315 = vadd.f32 %v1314, %v1293
        %v1316 = vadd.f32 %v1315, %v1295
        %v1317 = vadd.f32 %v1316, %v1297
        %v1318 = vrot.slane %v1317, 4
        %v1319 = vadd.f32 %v1317, %v1318
        %v1320 = vrot.slane %v1319, 2
        %v1321 = vadd.f32 %v1319, %v1320
        %v1322 = vrot.slane %v1321, 1
        %v1323 = vadd.f32 %v1321, %v1322
        %v1326 = vcombine.low %v1310, %v1323
        %v1328 = vunpack.c.l.s4 1966171168
        %v1329 = vunpack.c.0.s8 %v1328
        %v1330 = vlaneseq
        %v1331 = vshrl.u32 %v1330, 7
        %v1332 = vsub.s32 %v1329, %v1331
        %v1333 = vrot.slane %v1326, %v1332
        %v1335 = vunpack.c.l.s4 1966171168
        %v1336 = vunpack.c.0.s8 %v1335
        %v1337 = vlaneseq
        %v1338 = vshrl.u32 %v1337, 7
        %v1339 = vsub.s32 %v1336, %v1338
        %v1340 = vrot.slane %v1333, %v1339
        %v1342 = vlaneseq
        %vm1343 = vcmp.ge.s32.totalorder %v1342, 0
        %vm1344 = vcmp.lt.s32.totalorder %v1342, 256
        %vm1345 = vmand %vm1343, %vm1344
        %1346 = vst.msk [vmem:[%s293] ss:$4 sm:$0x3] %vm1345, %v1340
        %v1347 = vmul.f32 %v1178, %v1245
        %v1348 = vmul.f32 %v1179, %v1245
        %v1349 = vmul.f32 %v1180, %v1250
        %v1350 = vmul.f32 %v1181, %v1250
        %v1351 = vmul.f32 %v1182, %v1255
        %v1352 = vmul.f32 %v1183, %v1255
        %v1353 = vmul.f32 %v1184, %v1260
        %v1354 = vmul.f32 %v1185, %v1260
        %v1355 = vmul.f32 %v1186, %v1265
        %v1356 = vmul.f32 %v1187, %v1265
        %v1357 = vmul.f32 %v1188, %v1270
        %v1358 = vmul.f32 %v1189, %v1270
        %v1359 = vmul.f32 %v1190, %v1275
        %v1360 = vmul.f32 %v1191, %v1275
        %v1361 = vmul.f32 %v1192, %v1280
        %v1362 = vmul.f32 %v1193, %v1280
        %v1363 = vadd.f32 %v1347, %v1349
        %v1364 = vadd.f32 %v1363, %v1351
        %v1365 = vadd.f32 %v1364, %v1353
        %v1366 = vadd.f32 %v1365, %v1355
        %v1367 = vadd.f32 %v1366, %v1357
        %v1368 = vadd.f32 %v1367, %v1359
        %v1369 = vadd.f32 %v1368, %v1361
        %v1370 = vrot.slane %v1369, 4
        %v1371 = vadd.f32 %v1369, %v1370
        %v1372 = vrot.slane %v1371, 2
        %v1373 = vadd.f32 %v1371, %v1372
        %v1374 = vrot.slane %v1373, 1
        %v1375 = vadd.f32 %v1373, %v1374
        %v1376 = vadd.f32 %v1348, %v1350
        %v1377 = vadd.f32 %v1376, %v1352
        %v1378 = vadd.f32 %v1377, %v1354
        %v1379 = vadd.f32 %v1378, %v1356
        %v1380 = vadd.f32 %v1379, %v1358
        %v1381 = vadd.f32 %v1380, %v1360
        %v1382 = vadd.f32 %v1381, %v1362
        %v1383 = vrot.slane %v1382, 4
        %v1384 = vadd.f32 %v1382, %v1383
        %v1385 = vrot.slane %v1384, 2
        %v1386 = vadd.f32 %v1384, %v1385
        %v1387 = vrot.slane %v1386, 1
        %v1388 = vadd.f32 %v1386, %v1387
        %v1391 = vcombine.low %v1375, %v1388
        %v1393 = vunpack.c.l.s4 1966171168
        %v1394 = vunpack.c.0.s8 %v1393
        %v1395 = vlaneseq
        %v1396 = vshrl.u32 %v1395, 7
        %v1397 = vsub.s32 %v1394, %v1396
        %v1398 = vrot.slane %v1391, %v1397
        %v1400 = vunpack.c.l.s4 1966171168
        %v1401 = vunpack.c.0.s8 %v1400
        %v1402 = vlaneseq
        %v1403 = vshrl.u32 %v1402, 7
        %v1404 = vsub.s32 %v1401, %v1403
        %v1405 = vrot.slane %v1398, %v1404
        %s1407 = scalar_lea.vmem %s293, 1
        %1408 = vst.msk [vmem:[%s1407] ss:$4 sm:$0x3] %vm1345, %v1405
        %v1409 = vmul.f32 %v1194, %v1245
        %v1410 = vmul.f32 %v1195, %v1245
        %v1411 = vmul.f32 %v1196, %v1250
        %v1412 = vmul.f32 %v1197, %v1250
        %v1413 = vmul.f32 %v1198, %v1255
        %v1414 = vmul.f32 %v1199, %v1255
        %v1415 = vmul.f32 %v1200, %v1260
        %v1416 = vmul.f32 %v1201, %v1260
        %v1417 = vmul.f32 %v1202, %v1265
        %v1418 = vmul.f32 %v1203, %v1265
        %v1419 = vmul.f32 %v1204, %v1270
        %v1420 = vmul.f32 %v1205, %v1270
        %v1421 = vmul.f32 %v1206, %v1275
        %v1422 = vmul.f32 %v1207, %v1275
        %v1423 = vmul.f32 %v1208, %v1280
        %v1424 = vmul.f32 %v1209, %v1280
        %v1425 = vadd.f32 %v1409, %v1411
        %v1426 = vadd.f32 %v1425, %v1413
        %v1427 = vadd.f32 %v1426, %v1415
        %v1428 = vadd.f32 %v1427, %v1417
        %v1429 = vadd.f32 %v1428, %v1419
        %v1430 = vadd.f32 %v1429, %v1421
        %v1431 = vadd.f32 %v1430, %v1423
        %v1432 = vrot.slane %v1431, 4
        %v1433 = vadd.f32 %v1431, %v1432
        %v1434 = vrot.slane %v1433, 2
        %v1435 = vadd.f32 %v1433, %v1434
        %v1436 = vrot.slane %v1435, 1
        %v1437 = vadd.f32 %v1435, %v1436
        %v1438 = vadd.f32 %v1410, %v1412
        %v1439 = vadd.f32 %v1438, %v1414
        %v1440 = vadd.f32 %v1439, %v1416
        %v1441 = vadd.f32 %v1440, %v1418
        %v1442 = vadd.f32 %v1441, %v1420
        %v1443 = vadd.f32 %v1442, %v1422
        %v1444 = vadd.f32 %v1443, %v1424
        %v1445 = vrot.slane %v1444, 4
        %v1446 = vadd.f32 %v1444, %v1445
        %v1447 = vrot.slane %v1446, 2
        %v1448 = vadd.f32 %v1446, %v1447
        %v1449 = vrot.slane %v1448, 1
        %v1450 = vadd.f32 %v1448, %v1449
        %v1453 = vcombine.low %v1437, %v1450
        %v1455 = vunpack.c.l.s4 1966171168
        %v1456 = vunpack.c.0.s8 %v1455
        %v1457 = vlaneseq
        %v1458 = vshrl.u32 %v1457, 7
        %v1459 = vsub.s32 %v1456, %v1458
        %v1460 = vrot.slane %v1453, %v1459
        %v1462 = vunpack.c.l.s4 1966171168
        %v1463 = vunpack.c.0.s8 %v1462
        %v1464 = vlaneseq
        %v1465 = vshrl.u32 %v1464, 7
        %v1466 = vsub.s32 %v1463, %v1465
        %v1467 = vrot.slane %v1460, %v1466
        %s1469 = scalar_lea.vmem %s293, 2
        %1470 = vst.msk [vmem:[%s1469] ss:$4 sm:$0x3] %vm1345, %v1467
        %v1471 = vmul.f32 %v1210, %v1245
        %v1472 = vmul.f32 %v1211, %v1245
        %v1473 = vmul.f32 %v1212, %v1250
        %v1474 = vmul.f32 %v1213, %v1250
        %v1475 = vmul.f32 %v1214, %v1255
        %v1476 = vmul.f32 %v1215, %v1255
        %v1477 = vmul.f32 %v1216, %v1260
        %v1478 = vmul.f32 %v1217, %v1260
        %v1479 = vmul.f32 %v1218, %v1265
        %v1480 = vmul.f32 %v1219, %v1265
        %v1481 = vmul.f32 %v1220, %v1270
        %v1482 = vmul.f32 %v1221, %v1270
        %v1483 = vmul.f32 %v1222, %v1275
        %v1484 = vmul.f32 %v1223, %v1275
        %v1485 = vmul.f32 %v1224, %v1280
        %v1486 = vmul.f32 %v1225, %v1280
        %v1487 = vadd.f32 %v1471, %v1473
        %v1488 = vadd.f32 %v1487, %v1475
        %v1489 = vadd.f32 %v1488, %v1477
        %v1490 = vadd.f32 %v1489, %v1479
        %v1491 = vadd.f32 %v1490, %v1481
        %v1492 = vadd.f32 %v1491, %v1483
        %v1493 = vadd.f32 %v1492, %v1485
        %v1494 = vrot.slane %v1493, 4
        %v1495 = vadd.f32 %v1493, %v1494
        %v1496 = vrot.slane %v1495, 2
        %v1497 = vadd.f32 %v1495, %v1496
        %v1498 = vrot.slane %v1497, 1
        %v1499 = vadd.f32 %v1497, %v1498
        %v1500 = vadd.f32 %v1472, %v1474
        %v1501 = vadd.f32 %v1500, %v1476
        %v1502 = vadd.f32 %v1501, %v1478
        %v1503 = vadd.f32 %v1502, %v1480
        %v1504 = vadd.f32 %v1503, %v1482
        %v1505 = vadd.f32 %v1504, %v1484
        %v1506 = vadd.f32 %v1505, %v1486
        %v1507 = vrot.slane %v1506, 4
        %v1508 = vadd.f32 %v1506, %v1507
        %v1509 = vrot.slane %v1508, 2
        %v1510 = vadd.f32 %v1508, %v1509
        %v1511 = vrot.slane %v1510, 1
        %v1512 = vadd.f32 %v1510, %v1511
        %v1515 = vcombine.low %v1499, %v1512
        %v1517 = vunpack.c.l.s4 1966171168
        %v1518 = vunpack.c.0.s8 %v1517
        %v1519 = vlaneseq
        %v1520 = vshrl.u32 %v1519, 7
        %v1521 = vsub.s32 %v1518, %v1520
        %v1522 = vrot.slane %v1515, %v1521
        %v1524 = vunpack.c.l.s4 1966171168
        %v1525 = vunpack.c.0.s8 %v1524
        %v1526 = vlaneseq
        %v1527 = vshrl.u32 %v1526, 7
        %v1528 = vsub.s32 %v1525, %v1527
        %v1529 = vrot.slane %v1522, %v1528
        %s1531 = scalar_lea.vmem %s293, 3
        %1532 = vst.msk [vmem:[%s1531] ss:$4 sm:$0x3] %vm1345, %v1529
        %s1533 = smul.u32 2, %s15
        %p1534 = scmp.lt.s32.totalorder %s1533, 3
        %s1535 = scalar_select %p1534, %s1533, 3
        %s1536 = smul.addr %s1535, 4
        %s1537 = scalar_lea.vmem %s4, %s1536
        // Predicated region
        $region75: #{sdf_network_forward.1} parent=69 // pred_check
          %p1538 = pneg %p122
        $region76: #{sdf_network_forward.1} parent=69 // pred_check_branch
          %1540 = sbr.rel (%p1538) target = $region78
        $region77: #{sdf_network_forward.1} parent=69 // pred_region
          %s1541 = smul.u32 2, %s15
        $region78: #{sdf_network_forward.1} parent=69 // pred_fallthru
          _
      $region70: #{sdf_network_forward.1} parent=5 // pred_fallthru
        _
      %p1542 = scmp.le.s32.totalorder 2, %s10
      // Predicated region
      $region79: #{sdf_network_forward.1} parent=5 // pred_check
        %p1543 = pneg %p1542
      $region80: #{sdf_network_forward.1} parent=5 // pred_check_branch
        %1545 = sbr.rel (%p1543) target = $region82
      $region81: #{sdf_network_forward.1} parent=5 // pred_region
        %s1546 = ssub.s32 %s10, 2
        // Predicated region
        $region83: #{sdf_network_forward.1} parent=81 // pred_check
          %p1547 = pneg %p128
        $region84: #{sdf_network_forward.1} parent=81 // pred_check_branch
          %1549 = sbr.rel (%p1547) target = $region86
        $region85: #{sdf_network_forward.1} parent=81 // pred_region
          %s1550 = smul.u32 2, %s16
          %p1551 = scmp.lt.s32.totalorder %s1550, 3
          %s1552 = scalar_select %p1551, %s1550, 3
          %s1553 = smul.addr %s1552, 4
          %s1554 = scalar_lea.vmem %s4, %s1553
        $region86: #{sdf_network_forward.1} parent=81 // pred_fallthru
          _
      $region82: #{sdf_network_forward.1} parent=5 // pred_fallthru
        _
    $region6: #{sdf_network_forward.1} parent=1 // loop_footer
      %s14 = sadd.s32 1, %s10
    $region7: #{sdf_network_forward.1} parent=1 // loop_footer_branch
      %9 = sbr.rel target = $region3
    $region8: #{sdf_network_forward.1} parent=1 // loop_exit
      _

</llo_original>
